<compile_context>
chip_gen: v7x
topology: tpu7x:2x2x1
jax: 0.10.0
libtpu: 0.0.40
codegen_flags: <defaults>
</compile_context>

<pallas_src>
import functools

import jax
import jax.numpy as jnp
from jax import lax
from jax.experimental import pallas as pl
from jax.experimental.pallas import tpu as pltpu


def reg_aug_kernel(t_ref, z_ref, eps_ref, w1_ref, b1_ref, tw_ref, w2_ref, b2_ref,
                   w1t_ref, w2t_ref, dz_ref, red_ref):
    t = t_ref[0, 0]                       # scalar time, lives in SMEM
    z = z_ref[...]                        # (TB, D)  bf16
    eps = eps_ref[...]                    # (TB, D)  bf16
    d_true = z.shape[1]

    # ---- forward pass of the ODE function: f(t, z) ----
    pre = (jnp.dot(z, w1_ref[...], preferred_element_type=jnp.float32)
           + b1_ref[...] + t * tw_ref[...])                                    # (TB, H) f32
    h = jnp.tanh(pre)                                                          # (TB, H) f32
    dz = (jnp.dot(h.astype(jnp.bfloat16), w2_ref[...],
                  preferred_element_type=jnp.float32)
          + b2_ref[...])                                                       # (TB, D) f32
    dz_ref[...] = dz

    # ---- analytic VJP wrt z with cotangent eps (== torch.autograd.grad(f, z, eps)) ----
    # eps @ W2^T and g @ W1^T use pre-transposed weights (VMEM-resident), so the
    # MXU consumes them directly with no in-kernel transpose.
    ew2 = jnp.dot(eps, w2t_ref[...], preferred_element_type=jnp.float32)       # (TB, H) f32
    g = ew2 * (1.0 - h * h)                                                    # (TB, H) f32
    e_dzdx = jnp.dot(g.astype(jnp.bfloat16), w1t_ref[...],
                     preferred_element_type=jnp.float32)                       # (TB, D) f32

    # ---- per-sample reductions (all f32) ----
    eps32 = eps.astype(jnp.float32)
    dlogdet = jnp.sum(e_dzdx * eps32, axis=1, keepdims=True)                   # (TB, 1)
    de = jnp.sum(dz * dz, axis=1, keepdims=True)                               # (TB, 1)
    dn = jnp.sum(e_dzdx * e_dzdx, axis=1, keepdims=True) * (1.0 / d_true)      # (TB, 1)

    # Compact fused slab: lane 0 = dlog_det, lane 1 = dE, lane 2 = dn, rest 0.
    lane = lax.broadcasted_iota(jnp.int32, red_ref.shape, 1)                   # (TB, 8)
    red_ref[...] = (jnp.where(lane == 0, dlogdet, 0.0)
                    + jnp.where(lane == 1, de, 0.0)
                    + jnp.where(lane == 2, dn, 0.0))


@functools.partial(jax.jit, static_argnames=("tile_b",))
def reg_aug_mnist_forward(t, z_img, eps_img, params, *, tile_b=256):
    """t: scalar, z_img/eps_img: (B, C, H, W) float32, params: dict of MLP weights."""
    B = z_img.shape[0]
    D = z_img.shape[1] * z_img.shape[2] * z_img.shape[3]

    # bf16 MXU operands (halves the dominant DMA streams); reductions stay f32.
    z = z_img.reshape(B, D).astype(jnp.bfloat16)
    eps = eps_img.reshape(B, D).astype(jnp.bfloat16)
    t2d = jnp.asarray(t, jnp.float32).reshape(1, 1)

    w1 = params["w1"].astype(jnp.bfloat16)          # (D, H)
    w2 = params["w2"].astype(jnp.bfloat16)          # (H, D)
    w1t = w1.T                                      # (H, D) — for g @ W1^T
    w2t = w2.T                                      # (D, H) — for eps @ W2^T
    b1 = params["b1"].astype(jnp.float32)           # (1, H)
    tw = params["tw"].astype(jnp.float32)           # (1, H)
    b2 = params["b2"].astype(jnp.float32)           # (1, D)
    HID = w1.shape[1]

    # Batch tile: big enough to fill MXU rows & amortize per-step overhead; keep
    # >=2 grid steps when B allows so the "parallel" axis feeds both TCs on v7x.
    TB = min(tile_b, B)
    if B % TB != 0:
        TB = B                     # full-array block is always legal; avoids padded tiles
    grid = (B // TB,)

    # z / eps / dz / red tiled over batch; weights use constant index_maps so
    # they are DMA'd once and stay VMEM-resident across all grid steps.
    act_spec = pl.BlockSpec((TB, D), lambda i: (i, 0))
    w1_spec = pl.BlockSpec((D, HID), lambda i: (0, 0))
    b1_spec = pl.BlockSpec((1, HID), lambda i: (0, 0))
    tw_spec = pl.BlockSpec((1, HID), lambda i: (0, 0))
    w2_spec = pl.BlockSpec((HID, D), lambda i: (0, 0))
    b2_spec = pl.BlockSpec((1, D), lambda i: (0, 0))
    w1t_spec = pl.BlockSpec((HID, D), lambda i: (0, 0))
    w2t_spec = pl.BlockSpec((D, HID), lambda i: (0, 0))
    t_spec = pl.BlockSpec(memory_space=pltpu.MemorySpace.SMEM)     # whole (1,1) scalar
    red_spec = pl.BlockSpec((TB, 8), lambda i: (i, 0))             # compact reduction slab

    out_shape = (
        jax.ShapeDtypeStruct((B, D), jnp.float32),   # dz_dt (flattened, f32 for integrator)
        jax.ShapeDtypeStruct((B, 8), jnp.float32),   # fused reductions slab
    )

    # VMEM budget from the actual double-buffered tile footprint (+ headroom),
    # well under 64 MiB (v7x) / 128 MiB (v5e/v6e).
    tile_bytes = (2 * TB * D * 2          # z + eps bf16 tiles
                  + TB * D * 4            # dz f32 tile
                  + TB * 8 * 4            # reduction slab
                  + 4 * D * HID * 2       # w1, w2, w1t, w2t (bf16)
                  + (2 * HID + D) * 4)    # biases / time weight
    vmem_limit = min(max(2 * tile_bytes + (8 << 20), 16 << 20), 48 << 20)

    dz, red = pl.pallas_call(
        reg_aug_kernel,
        out_shape=out_shape,
        grid=grid,
        in_specs=[t_spec, act_spec, act_spec,
                  w1_spec, b1_spec, tw_spec, w2_spec, b2_spec,
                  w1t_spec, w2t_spec],
        out_specs=(act_spec, red_spec),
        compiler_params=pltpu.CompilerParams(
            dimension_semantics=("parallel",),          # megacore shard on v7x
            vmem_limit_bytes=int(vmem_limit),
        ),
    )(t2d, z, eps, w1, b1, tw, w2, b2, w1t, w2t)

    dz_dt = dz.reshape(z_img.shape)
    dlog_det_dt = red[:, 0:1]
    dE_dt = red[:, 1:2]
    dn_dt = red[:, 2:3]
    return dz_dt, dlog_det_dt, dE_dt, dn_dt


def make_params(key, d, hidden):
    k1, k2, k3, k4, k5 = jax.random.split(key, 5)
    s1 = 1.0 / jnp.sqrt(jnp.float32(d))
    s2 = 1.0 / jnp.sqrt(jnp.float32(hidden))
    return {
        "w1": jax.random.normal(k1, (d, hidden), jnp.float32) * s1,
        "b1": jax.random.normal(k2, (1, hidden), jnp.float32) * 0.01,
        "tw": jax.random.normal(k3, (1, hidden), jnp.float32) * 0.01,
        "w2": jax.random.normal(k4, (hidden, d), jnp.float32) * s2,
        "b2": jax.random.normal(k5, (1, d), jnp.float32) * 0.01,
    }


def reference_forward(t, z_img, eps_img, params):
    """Pure-JAX reference mirroring the kernel's bf16 operand casts (f32 math)."""
    B = z_img.shape[0]
    D = z_img.shape[1] * z_img.shape[2] * z_img.shape[3]
    f32, bf16 = jnp.float32, jnp.bfloat16
    hi = lax.Precision.HIGHEST
    z = z_img.reshape(B, D).astype(bf16).astype(f32)
    eps = eps_img.reshape(B, D).astype(bf16).astype(f32)
    w1 = params["w1"].astype(bf16).astype(f32)
    w2 = params["w2"].astype(bf16).astype(f32)
    b1, tw, b2 = params["b1"], params["tw"], params["b2"]
    pre = jnp.dot(z, w1, precision=hi) + b1 + jnp.float32(t) * tw
    h = jnp.tanh(pre)
    dz = jnp.dot(h.astype(bf16).astype(f32), w2, precision=hi) + b2
    ew2 = jnp.dot(eps, w2.T, precision=hi)
    g = ew2 * (1.0 - h * h)
    e_dzdx = jnp.dot(g.astype(bf16).astype(f32), w1.T, precision=hi)
    dlogdet = jnp.sum(e_dzdx * eps, axis=1, keepdims=True)
    dE = jnp.sum(dz * dz, axis=1, keepdims=True)
    dn = jnp.mean(e_dzdx ** 2, axis=1, keepdims=True)
    return dz.reshape(z_img.shape), dlogdet, dE, dn


if __name__ == "__main__":
    key = jax.random.PRNGKey(0)
    kz, keps, kp = jax.random.split(key, 3)

    # Small MNIST-like problem, but with B=512 / TB=256 so the grid has 2
    # parallel tiles (both TensorCores busy on v7x) and each matmul sees full
    # MXU rows.
    B, C, H, W = 512, 1, 16, 16
    HIDDEN = 128
    D = C * H * W

    z_img = jax.random.normal(kz, (B, C, H, W), jnp.float32)
    # epsilon = torch.randn_like(z) -> deterministic Gaussian noise supplied as input.
    eps_img = jax.random.normal(keps, (B, C, H, W), jnp.float32)
    t = jnp.float32(0.5)
    params = make_params(kp, D, HIDDEN)

    dz_dt, dlog_det_dt, dE_dt, dn_dt = reg_aug_mnist_forward(
        t, z_img, eps_img, params, tile_b=256)
    jax.block_until_ready((dz_dt, dlog_det_dt, dE_dt, dn_dt))

    assert dz_dt.shape == (B, C, H, W)
    assert dlog_det_dt.shape == (B, 1)
    assert dE_dt.shape == (B, 1)
    assert dn_dt.shape == (B, 1)
    assert bool(jnp.all(jnp.isfinite(dz_dt)))
    assert bool(jnp.all(jnp.isfinite(dlog_det_dt)))
    assert bool(jnp.all(jnp.isfinite(dE_dt)))
    assert bool(jnp.all(jnp.isfinite(dn_dt)))

    # Numerics check against a pure-JAX reference with matching precision.
    r_dz, r_dld, r_dE, r_dn = reference_forward(t, z_img, eps_img, params)
    assert bool(jnp.allclose(dz_dt, r_dz, rtol=2e-2, atol=2e-2))
    assert bool(jnp.allclose(dlog_det_dt, r_dld, rtol=2e-2, atol=2e-2))
    assert bool(jnp.allclose(dE_dt, r_dE, rtol=2e-2, atol=2e-2))
    assert bool(jnp.allclose(dn_dt, r_dn, rtol=2e-2, atol=2e-2))

    print("KERNEL_OK")
</pallas_src>

<mosaic_0001>
module attributes {stable_mosaic.version = 11 : i64} {
  func.func @reg_aug_kernel(%arg0: i32, %arg1: memref<1x1xf32, #tpu.memory_space<smem>>, %arg2: memref<256x256xbf16, #tpu.memory_space<vmem>>, %arg3: memref<256x256xbf16, #tpu.memory_space<vmem>>, %arg4: memref<256x128xbf16, #tpu.memory_space<vmem>>, %arg5: memref<1x128xf32, #tpu.memory_space<vmem>>, %arg6: memref<1x128xf32, #tpu.memory_space<vmem>>, %arg7: memref<128x256xbf16, #tpu.memory_space<vmem>>, %arg8: memref<1x256xf32, #tpu.memory_space<vmem>>, %arg9: memref<128x256xbf16, #tpu.memory_space<vmem>>, %arg10: memref<256x128xbf16, #tpu.memory_space<vmem>>, %arg11: memref<256x256xf32, #tpu.memory_space<vmem>>, %arg12: memref<256x8xf32, #tpu.memory_space<vmem>>) attributes {dimension_semantics = [#tpu.dimension_semantics<parallel>], iteration_bounds = array<i64: 2>, scalar_prefetch = 0 : i64, scratch_operands = 0 : i64, tpu.core_type = #tpu.core_type<tc>, window_params = [{transform_indices = @transform_0, window_bounds = array<i64: 1, 1>}, {transform_indices = @transform_1, window_bounds = array<i64: 256, 256>}, {transform_indices = @transform_2, window_bounds = array<i64: 256, 256>}, {pipeline_mode = #tpu.pipeline_mode<synchronous>, transform_indices = @transform_3, window_bounds = array<i64: 256, 128>}, {pipeline_mode = #tpu.pipeline_mode<synchronous>, transform_indices = @transform_4, window_bounds = array<i64: 1, 128>}, {pipeline_mode = #tpu.pipeline_mode<synchronous>, transform_indices = @transform_5, window_bounds = array<i64: 1, 128>}, {pipeline_mode = #tpu.pipeline_mode<synchronous>, transform_indices = @transform_6, window_bounds = array<i64: 128, 256>}, {pipeline_mode = #tpu.pipeline_mode<synchronous>, transform_indices = @transform_7, window_bounds = array<i64: 1, 256>}, {pipeline_mode = #tpu.pipeline_mode<synchronous>, transform_indices = @transform_8, window_bounds = array<i64: 128, 256>}, {pipeline_mode = #tpu.pipeline_mode<synchronous>, transform_indices = @transform_9, window_bounds = array<i64: 256, 128>}, {transform_indices = @transform_10, window_bounds = array<i64: 256, 256>}, {transform_indices = @transform_11, window_bounds = array<i64: 256, 8>}]} {
    %c0 = arith.constant 0 : index
    %c0_0 = arith.constant 0 : index
    %0 = memref.load %arg1[%c0, %c0_0] : memref<1x1xf32, #tpu.memory_space<smem>>
    %c0_1 = arith.constant 0 : index
    %c0_2 = arith.constant 0 : index
    %1 = vector.load %arg2[%c0_1, %c0_2] : memref<256x256xbf16, #tpu.memory_space<vmem>>, vector<256x256xbf16>
    %c0_3 = arith.constant 0 : index
    %c0_4 = arith.constant 0 : index
    %2 = vector.load %arg3[%c0_3, %c0_4] : memref<256x256xbf16, #tpu.memory_space<vmem>>, vector<256x256xbf16>
    %c0_5 = arith.constant 0 : index
    %c0_6 = arith.constant 0 : index
    %3 = vector.load %arg4[%c0_5, %c0_6] : memref<256x128xbf16, #tpu.memory_space<vmem>>, vector<256x128xbf16>
    %cst = arith.constant dense<0.000000e+00> : vector<256x128xf32>
    %4 = tpu.matmul %1, %3, %cst {dimension_numbers = #tpu.dot_dimension_numbers<[1], [0], [0], [1], [0, 0, 1, 1], [], []>} : vector<256x256xbf16>, vector<256x128xbf16>, vector<256x128xf32> -> vector<256x128xf32>
    %c0_7 = arith.constant 0 : index
    %c0_8 = arith.constant 0 : index
    %5 = vector.load %arg5[%c0_7, %c0_8] : memref<1x128xf32, #tpu.memory_space<vmem>>, vector<1x128xf32>
    %6 = vector.broadcast %5 : vector<1x128xf32> to vector<256x128xf32>
    %7 = arith.addf %4, %6 : vector<256x128xf32>
    %c0_9 = arith.constant 0 : index
    %c0_10 = arith.constant 0 : index
    %8 = vector.load %arg6[%c0_9, %c0_10] : memref<1x128xf32, #tpu.memory_space<vmem>>, vector<1x128xf32>
    %9 = vector.broadcast %0 : f32 to vector<1x128xf32>
    %10 = arith.mulf %9, %8 : vector<1x128xf32>
    %11 = vector.broadcast %10 : vector<1x128xf32> to vector<256x128xf32>
    %12 = arith.addf %7, %11 : vector<256x128xf32>
    %13 = math.tanh %12 : vector<256x128xf32>
    %14 = arith.truncf %13 : vector<256x128xf32> to vector<256x128xbf16>
    %c0_11 = arith.constant 0 : index
    %c0_12 = arith.constant 0 : index
    %15 = vector.load %arg7[%c0_11, %c0_12] : memref<128x256xbf16, #tpu.memory_space<vmem>>, vector<128x256xbf16>
    %cst_13 = arith.constant dense<0.000000e+00> : vector<256x256xf32>
    %16 = tpu.matmul %14, %15, %cst_13 {dimension_numbers = #tpu.dot_dimension_numbers<[1], [0], [0], [1], [0, 0, 1, 1], [], []>} : vector<256x128xbf16>, vector<128x256xbf16>, vector<256x256xf32> -> vector<256x256xf32>
    %c0_14 = arith.constant 0 : index
    %c0_15 = arith.constant 0 : index
    %17 = vector.load %arg8[%c0_14, %c0_15] : memref<1x256xf32, #tpu.memory_space<vmem>>, vector<1x256xf32>
    %18 = vector.broadcast %17 : vector<1x256xf32> to vector<256x256xf32>
    %19 = arith.addf %16, %18 : vector<256x256xf32>
    %c0_16 = arith.constant 0 : index
    %c0_17 = arith.constant 0 : index
    %20 = vector.load %arg11[%c0_16, %c0_17] : memref<256x256xf32, #tpu.memory_space<vmem>>, vector<256x256xf32>
    tpu.vector_store %arg11[%c0_16, %c0_17], %19 {strides = array<i32>} : memref<256x256xf32, #tpu.memory_space<vmem>>, vector<256x256xf32>,
    %c0_18 = arith.constant 0 : index
    %c0_19 = arith.constant 0 : index
    %21 = vector.load %arg10[%c0_18, %c0_19] : memref<256x128xbf16, #tpu.memory_space<vmem>>, vector<256x128xbf16>
    %cst_20 = arith.constant dense<0.000000e+00> : vector<256x128xf32>
    %22 = tpu.matmul %2, %21, %cst_20 {dimension_numbers = #tpu.dot_dimension_numbers<[1], [0], [0], [1], [0, 0, 1, 1], [], []>} : vector<256x256xbf16>, vector<256x128xbf16>, vector<256x128xf32> -> vector<256x128xf32>
    %23 = arith.mulf %13, %13 : vector<256x128xf32>
    %cst_21 = arith.constant 1.000000e+00 : f32
    %24 = vector.broadcast %cst_21 : f32 to vector<256x128xf32>
    %25 = arith.subf %24, %23 : vector<256x128xf32>
    %26 = arith.mulf %22, %25 : vector<256x128xf32>
    %27 = arith.truncf %26 : vector<256x128xf32> to vector<256x128xbf16>
    %c0_22 = arith.constant 0 : index
    %c0_23 = arith.constant 0 : index
    %28 = vector.load %arg9[%c0_22, %c0_23] : memref<128x256xbf16, #tpu.memory_space<vmem>>, vector<128x256xbf16>
    %cst_24 = arith.constant dense<0.000000e+00> : vector<256x256xf32>
    %29 = tpu.matmul %27, %28, %cst_24 {dimension_numbers = #tpu.dot_dimension_numbers<[1], [0], [0], [1], [0, 0, 1, 1], [], []>} : vector<256x128xbf16>, vector<128x256xbf16>, vector<256x256xf32> -> vector<256x256xf32>
    %30 = arith.extf %2 : vector<256x256xbf16> to vector<256x256xf32>
    %31 = arith.mulf %29, %30 : vector<256x256xf32>
    %cst_25 = arith.constant dense<0.000000e+00> : vector<256xf32>
    %32 = vector.multi_reduction <add>, %31, %cst_25 [1] : vector<256x256xf32> to vector<256xf32>
    %33 = vector.shape_cast %32 : vector<256xf32> to vector<256x1xf32>
    %34 = arith.mulf %19, %19 : vector<256x256xf32>
    %cst_26 = arith.constant dense<0.000000e+00> : vector<256xf32>
    %35 = vector.multi_reduction <add>, %34, %cst_26 [1] : vector<256x256xf32> to vector<256xf32>
    %36 = vector.shape_cast %35 : vector<256xf32> to vector<256x1xf32>
    %37 = arith.mulf %29, %29 : vector<256x256xf32>
    %cst_27 = arith.constant dense<0.000000e+00> : vector<256xf32>
    %38 = vector.multi_reduction <add>, %37, %cst_27 [1] : vector<256x256xf32> to vector<256xf32>
    %39 = vector.shape_cast %38 : vector<256xf32> to vector<256x1xf32>
    %cst_28 = arith.constant 3.906250e-03 : f32
    %40 = vector.broadcast %cst_28 : f32 to vector<256x1xf32>
    %41 = arith.mulf %39, %40 : vector<256x1xf32>
    %42 = tpu.iota {dimensions = array<i32: 1>} : vector<256x8xi32>
    %c0_i32 = arith.constant 0 : i32
    %43 = vector.broadcast %c0_i32 : i32 to vector<256x8xi32>
    %44 = arith.cmpi eq, %42, %43 : vector<256x8xi32>
    %cst_29 = arith.constant 0.000000e+00 : f32
    %45 = vector.shape_cast %33 : vector<256x1xf32> to vector<256x1xf32>
    %46 = vector.broadcast %45 : vector<256x1xf32> to vector<256x8xf32>
    %47 = vector.broadcast %cst_29 : f32 to vector<256x8xf32>
    %48 = arith.select %44, %46, %47 : vector<256x8xi1>, vector<256x8xf32>
    %c1_i32 = arith.constant 1 : i32
    %49 = vector.broadcast %c1_i32 : i32 to vector<256x8xi32>
    %50 = arith.cmpi eq, %42, %49 : vector<256x8xi32>
    %cst_30 = arith.constant 0.000000e+00 : f32
    %51 = vector.shape_cast %36 : vector<256x1xf32> to vector<256x1xf32>
    %52 = vector.broadcast %51 : vector<256x1xf32> to vector<256x8xf32>
    %53 = vector.broadcast %cst_30 : f32 to vector<256x8xf32>
    %54 = arith.select %50, %52, %53 : vector<256x8xi1>, vector<256x8xf32>
    %55 = arith.addf %48, %54 : vector<256x8xf32>
    %c2_i32 = arith.constant 2 : i32
    %56 = vector.broadcast %c2_i32 : i32 to vector<256x8xi32>
    %57 = arith.cmpi eq, %42, %56 : vector<256x8xi32>
    %cst_31 = arith.constant 0.000000e+00 : f32
    %58 = vector.shape_cast %41 : vector<256x1xf32> to vector<256x1xf32>
    %59 = vector.broadcast %58 : vector<256x1xf32> to vector<256x8xf32>
    %60 = vector.broadcast %cst_31 : f32 to vector<256x8xf32>
    %61 = arith.select %57, %59, %60 : vector<256x8xi1>, vector<256x8xf32>
    %62 = arith.addf %55, %61 : vector<256x8xf32>
    %c0_32 = arith.constant 0 : index
    %c0_33 = arith.constant 0 : index
    %63 = vector.load %arg12[%c0_32, %c0_33] : memref<256x8xf32, #tpu.memory_space<vmem>>, vector<256x8xf32>
    tpu.vector_store %arg12[%c0_32, %c0_33], %62 {strides = array<i32>} : memref<256x8xf32, #tpu.memory_space<vmem>>, vector<256x8xf32>,
    return
  }
  func.func @transform_0(%arg0: i32) -> (i32, i32) {
    %c0_i32 = arith.constant 0 : i32
    %c0_i32_0 = arith.constant 0 : i32
    %c0_i32_1 = arith.constant 0 : i32
    return %c0_i32, %c0_i32_0 : i32, i32
  }
  func.func @transform_1(%arg0: i32) -> (i32, i32) {
    %c0_i32 = arith.constant 0 : i32
    %c0_i32_0 = arith.constant 0 : i32
    return %arg0, %c0_i32 : i32, i32
  }
  func.func @transform_2(%arg0: i32) -> (i32, i32) {
    %c0_i32 = arith.constant 0 : i32
    %c0_i32_0 = arith.constant 0 : i32
    return %arg0, %c0_i32 : i32, i32
  }
  func.func @transform_3(%arg0: i32) -> (i32, i32) {
    %c0_i32 = arith.constant 0 : i32
    %c0_i32_0 = arith.constant 0 : i32
    %c0_i32_1 = arith.constant 0 : i32
    return %c0_i32, %c0_i32_0 : i32, i32
  }
  func.func @transform_4(%arg0: i32) -> (i32, i32) {
    %c0_i32 = arith.constant 0 : i32
    %c0_i32_0 = arith.constant 0 : i32
    %c0_i32_1 = arith.constant 0 : i32
    return %c0_i32, %c0_i32_0 : i32, i32
  }
  func.func @transform_5(%arg0: i32) -> (i32, i32) {
    %c0_i32 = arith.constant 0 : i32
    %c0_i32_0 = arith.constant 0 : i32
    %c0_i32_1 = arith.constant 0 : i32
    return %c0_i32, %c0_i32_0 : i32, i32
  }
  func.func @transform_6(%arg0: i32) -> (i32, i32) {
    %c0_i32 = arith.constant 0 : i32
    %c0_i32_0 = arith.constant 0 : i32
    %c0_i32_1 = arith.constant 0 : i32
    return %c0_i32, %c0_i32_0 : i32, i32
  }
  func.func @transform_7(%arg0: i32) -> (i32, i32) {
    %c0_i32 = arith.constant 0 : i32
    %c0_i32_0 = arith.constant 0 : i32
    %c0_i32_1 = arith.constant 0 : i32
    return %c0_i32, %c0_i32_0 : i32, i32
  }
  func.func @transform_8(%arg0: i32) -> (i32, i32) {
    %c0_i32 = arith.constant 0 : i32
    %c0_i32_0 = arith.constant 0 : i32
    %c0_i32_1 = arith.constant 0 : i32
    return %c0_i32, %c0_i32_0 : i32, i32
  }
  func.func @transform_9(%arg0: i32) -> (i32, i32) {
    %c0_i32 = arith.constant 0 : i32
    %c0_i32_0 = arith.constant 0 : i32
    %c0_i32_1 = arith.constant 0 : i32
    return %c0_i32, %c0_i32_0 : i32, i32
  }
  func.func @transform_10(%arg0: i32) -> (i32, i32) {
    %c0_i32 = arith.constant 0 : i32
    %c0_i32_0 = arith.constant 0 : i32
    return %arg0, %c0_i32 : i32, i32
  }
  func.func @transform_11(%arg0: i32) -> (i32, i32) {
    %c0_i32 = arith.constant 0 : i32
    %c0_i32_0 = arith.constant 0 : i32
    return %arg0, %c0_i32 : i32, i32
  }
}

</mosaic_0001>

<llo_original>
// kernel: reg_aug_mnist_forward.1
$region0: #{reg_aug_mnist_forward.1}
  #allocation0 [shape = 'u32[]', space=smem, size = 0x4, offset = 0x4, fixed_abs, tag = 'smem constant byte address 0x4 - core index']
  #allocation1 [shape = 'u32[144,128]{1,0:T(1,128)}', space=vmem, size = 0x12000, scoped, tag = 'internal scratch']
  #allocation2 [shape = 'f32[1,1]{1,0:T(1,128)S(6)}', space=smem, size = 0x200, scoped, tag = 'scoped memory for reg_aug_mnist_forward.1']
  %s0 = inlined_call_operand.<no memory space> [shape: f32[1,1], index: 0, kind: input, shape index: {}]
  %s1 = inlined_call_operand.vmem [shape: bf16[512,256], index: 1, kind: input, shape index: {}]
  %s2 = inlined_call_operand.vmem [shape: bf16[512,256], index: 2, kind: input, shape index: {}]
  %s3 = inlined_call_operand.vmem [shape: bf16[256,128], index: 3, kind: input, shape index: {}]
  %s4 = inlined_call_operand.vmem [shape: f32[1,128], index: 4, kind: input, shape index: {}]
  %s5 = inlined_call_operand.vmem [shape: f32[1,128], index: 5, kind: input, shape index: {}]
  %s6 = inlined_call_operand.vmem [shape: bf16[128,256], index: 6, kind: input, shape index: {}]
  %s7 = inlined_call_operand.vmem [shape: f32[1,256], index: 7, kind: input, shape index: {}]
  %s8 = inlined_call_operand.vmem [shape: bf16[128,256], index: 8, kind: input, shape index: {}]
  %s9 = inlined_call_operand.vmem [shape: bf16[256,128], index: 9, kind: input, shape index: {}]
  %s10 = inlined_call_operand.vmem [shape: f32[512,256], index: 10, kind: output, shape index: {0}]
  %s11 = inlined_call_operand.vmem [shape: f32[512,8], index: 11, kind: output, shape index: {1}]
  %12 = xla_tuple %s10, %s11
  %s13 = sld [smem:[#allocation0]]
  $region81: #{reg_aug_mnist_forward.1} parent=0
    _
  %s15 = ssub.s32 1, %s13
  %s16 = scalar_select 0, %s15, %s13
  %17 = sst [smem:[#allocation2]] %s0
  loop: start=0, step=1, limit=4
  $region2: #{reg_aug_mnist_forward.1} parent=0 // loop_pre_header
    _
  $region3: #{reg_aug_mnist_forward.1} parent=0 // loop_header
    %s19 = sphi 0, %s23
    %p20 = scmp.ge.s32.totalorder %s19, 4
    %s27 = sphi 0, %s27
    %s29 = sphi 0, %s27
    %s30 = sphi 0, %s29
    %s44 = sphi 0, %s30
    %s50 = sphi 0, %s52
    %s53 = sphi 0, %s50
    %s54 = sphi 0, %s53
    %s70 = sphi 0, %s54
    %s76 = sphi 0, %s78
    %s79 = sphi 0, %s76
    %s80 = sphi 0, %s79
    %s96 = sphi 0, %s80
    %s100 = sphi 0, %s100
    %s102 = sphi 0, %s100
    %s103 = sphi 0, %s102
    %s117 = sphi 0, %s103
    %s121 = sphi 0, %s121
    %s123 = sphi 0, %s121
    %s124 = sphi 0, %s123
    %s138 = sphi 0, %s124
    %s142 = sphi 0, %s142
    %s144 = sphi 0, %s142
    %s145 = sphi 0, %s144
    %s159 = sphi 0, %s145
    %s163 = sphi 0, %s163
    %s165 = sphi 0, %s163
    %s166 = sphi 0, %s165
    %s180 = sphi 0, %s166
    %s184 = sphi 0, %s184
    %s186 = sphi 0, %s184
    %s187 = sphi 0, %s186
    %s201 = sphi 0, %s187
    %s205 = sphi 0, %s205
    %s207 = sphi 0, %s205
    %s208 = sphi 0, %s207
    %s222 = sphi 0, %s208
    %s226 = sphi 0, %s226
    %s228 = sphi 0, %s226
    %s229 = sphi 0, %s228
    %s243 = sphi 0, %s229
    %s249 = sphi 0, %s251
    %s252 = sphi 0, %s249
    %s253 = sphi 0, %s252
    %s269 = sphi 0, %s253
    %s275 = sphi 0, %s277
    %s278 = sphi 0, %s275
    %s279 = sphi 0, %s278
    %s295 = sphi 0, %s279
  $region4: #{reg_aug_mnist_forward.1} parent=0 // loop_header_branch
    %22 = sbr.rel (%p20) target = $region8
  $region5: #{reg_aug_mnist_forward.1} parent=0 // loop_body
    %s24 = ssub.s32 %s19, 1
    %s25 = ssub.s32 %s19, 2
    %s26 = sadd.s32 %s19, 1
    %s28 = sadd.s32 %s27, 1
    %p31 = scmp.eq.s32.totalorder %s19, 1
    %p32 = scmp.ne.s32.totalorder %s27, %s29
    %p33 = scmp.eq.s32.totalorder %s19, 0
    %p34 = por %p32, %p33
    %p35 = scmp.ne.s32.totalorder %s27, %s29
    %p36 = scmp.eq.s32.totalorder %s24, 1
    %p37 = por %p35, %p36
    %p38 = scmp.ne.s32.totalorder %s29, %s30
    %p39 = scmp.eq.s32.totalorder %s24, 0
    %p40 = por %p38, %p39
    %p41 = scmp.ne.s32.totalorder %s29, %s30
    %p42 = scmp.eq.s32.totalorder %s25, 1
    %p43 = por %p41, %p42
    %p45 = scmp.ne.s32.totalorder %s30, %s44
    %p46 = scmp.eq.s32.totalorder %s25, 0
    %p47 = por %p45, %p46
    %s48 = ssub.s32 %s19, %s26
    %p49 = scmp.eq.s32.totalorder %s48, 0
    %s51 = sadd.s32 %s50, 1
    %s52 = scalar_select %p49, %s50, %s51
    %p55 = pneg %p49
    %p56 = scmp.eq.s32.totalorder %s19, 1
    %p57 = por %p55, %p56
    %p58 = scmp.ne.s32.totalorder %s50, %s53
    %p59 = scmp.eq.s32.totalorder %s19, 0
    %p60 = por %p58, %p59
    %p61 = scmp.ne.s32.totalorder %s50, %s53
    %p62 = scmp.eq.s32.totalorder %s24, 1
    %p63 = por %p61, %p62
    %p64 = scmp.ne.s32.totalorder %s53, %s54
    %p65 = scmp.eq.s32.totalorder %s24, 0
    %p66 = por %p64, %p65
    %p67 = scmp.ne.s32.totalorder %s53, %s54
    %p68 = scmp.eq.s32.totalorder %s25, 1
    %p69 = por %p67, %p68
    %p71 = scmp.ne.s32.totalorder %s54, %s70
    %p72 = scmp.eq.s32.totalorder %s25, 0
    %p73 = por %p71, %p72
    %s74 = ssub.s32 %s19, %s26
    %p75 = scmp.eq.s32.totalorder %s74, 0
    %s77 = sadd.s32 %s76, 1
    %s78 = scalar_select %p75, %s76, %s77
    %p81 = pneg %p75
    %p82 = scmp.eq.s32.totalorder %s19, 1
    %p83 = por %p81, %p82
    %p84 = scmp.ne.s32.totalorder %s76, %s79
    %p85 = scmp.eq.s32.totalorder %s19, 0
    %p86 = por %p84, %p85
    %p87 = scmp.ne.s32.totalorder %s76, %s79
    %p88 = scmp.eq.s32.totalorder %s24, 1
    %p89 = por %p87, %p88
    %p90 = scmp.ne.s32.totalorder %s79, %s80
    %p91 = scmp.eq.s32.totalorder %s24, 0
    %p92 = por %p90, %p91
    %p93 = scmp.ne.s32.totalorder %s79, %s80
    %p94 = scmp.eq.s32.totalorder %s25, 1
    %p95 = por %p93, %p94
    %p97 = scmp.ne.s32.totalorder %s80, %s96
    %p98 = scmp.eq.s32.totalorder %s25, 0
    %p99 = por %p97, %p98
    %s101 = sadd.s32 %s100, 1
    %p104 = scmp.eq.s32.totalorder %s19, 1
    %p105 = scmp.ne.s32.totalorder %s100, %s102
    %p106 = scmp.eq.s32.totalorder %s19, 0
    %p107 = por %p105, %p106
    %p108 = scmp.ne.s32.totalorder %s100, %s102
    %p109 = scmp.eq.s32.totalorder %s24, 1
    %p110 = por %p108, %p109
    %p111 = scmp.ne.s32.totalorder %s102, %s103
    %p112 = scmp.eq.s32.totalorder %s24, 0
    %p113 = por %p111, %p112
    %p114 = scmp.ne.s32.totalorder %s102, %s103
    %p115 = scmp.eq.s32.totalorder %s25, 1
    %p116 = por %p114, %p115
    %p118 = scmp.ne.s32.totalorder %s103, %s117
    %p119 = scmp.eq.s32.totalorder %s25, 0
    %p120 = por %p118, %p119
    %s122 = sadd.s32 %s121, 1
    %p125 = scmp.eq.s32.totalorder %s19, 1
    %p126 = scmp.ne.s32.totalorder %s121, %s123
    %p127 = scmp.eq.s32.totalorder %s19, 0
    %p128 = por %p126, %p127
    %p129 = scmp.ne.s32.totalorder %s121, %s123
    %p130 = scmp.eq.s32.totalorder %s24, 1
    %p131 = por %p129, %p130
    %p132 = scmp.ne.s32.totalorder %s123, %s124
    %p133 = scmp.eq.s32.totalorder %s24, 0
    %p134 = por %p132, %p133
    %p135 = scmp.ne.s32.totalorder %s123, %s124
    %p136 = scmp.eq.s32.totalorder %s25, 1
    %p137 = por %p135, %p136
    %p139 = scmp.ne.s32.totalorder %s124, %s138
    %p140 = scmp.eq.s32.totalorder %s25, 0
    %p141 = por %p139, %p140
    %s143 = sadd.s32 %s142, 1
    %p146 = scmp.eq.s32.totalorder %s19, 1
    %p147 = scmp.ne.s32.totalorder %s142, %s144
    %p148 = scmp.eq.s32.totalorder %s19, 0
    %p149 = por %p147, %p148
    %p150 = scmp.ne.s32.totalorder %s142, %s144
    %p151 = scmp.eq.s32.totalorder %s24, 1
    %p152 = por %p150, %p151
    %p153 = scmp.ne.s32.totalorder %s144, %s145
    %p154 = scmp.eq.s32.totalorder %s24, 0
    %p155 = por %p153, %p154
    %p156 = scmp.ne.s32.totalorder %s144, %s145
    %p157 = scmp.eq.s32.totalorder %s25, 1
    %p158 = por %p156, %p157
    %p160 = scmp.ne.s32.totalorder %s145, %s159
    %p161 = scmp.eq.s32.totalorder %s25, 0
    %p162 = por %p160, %p161
    %s164 = sadd.s32 %s163, 1
    %p167 = scmp.eq.s32.totalorder %s19, 1
    %p168 = scmp.ne.s32.totalorder %s163, %s165
    %p169 = scmp.eq.s32.totalorder %s19, 0
    %p170 = por %p168, %p169
    %p171 = scmp.ne.s32.totalorder %s163, %s165
    %p172 = scmp.eq.s32.totalorder %s24, 1
    %p173 = por %p171, %p172
    %p174 = scmp.ne.s32.totalorder %s165, %s166
    %p175 = scmp.eq.s32.totalorder %s24, 0
    %p176 = por %p174, %p175
    %p177 = scmp.ne.s32.totalorder %s165, %s166
    %p178 = scmp.eq.s32.totalorder %s25, 1
    %p179 = por %p177, %p178
    %p181 = scmp.ne.s32.totalorder %s166, %s180
    %p182 = scmp.eq.s32.totalorder %s25, 0
    %p183 = por %p181, %p182
    %s185 = sadd.s32 %s184, 1
    %p188 = scmp.eq.s32.totalorder %s19, 1
    %p189 = scmp.ne.s32.totalorder %s184, %s186
    %p190 = scmp.eq.s32.totalorder %s19, 0
    %p191 = por %p189, %p190
    %p192 = scmp.ne.s32.totalorder %s184, %s186
    %p193 = scmp.eq.s32.totalorder %s24, 1
    %p194 = por %p192, %p193
    %p195 = scmp.ne.s32.totalorder %s186, %s187
    %p196 = scmp.eq.s32.totalorder %s24, 0
    %p197 = por %p195, %p196
    %p198 = scmp.ne.s32.totalorder %s186, %s187
    %p199 = scmp.eq.s32.totalorder %s25, 1
    %p200 = por %p198, %p199
    %p202 = scmp.ne.s32.totalorder %s187, %s201
    %p203 = scmp.eq.s32.totalorder %s25, 0
    %p204 = por %p202, %p203
    %s206 = sadd.s32 %s205, 1
    %p209 = scmp.eq.s32.totalorder %s19, 1
    %p210 = scmp.ne.s32.totalorder %s205, %s207
    %p211 = scmp.eq.s32.totalorder %s19, 0
    %p212 = por %p210, %p211
    %p213 = scmp.ne.s32.totalorder %s205, %s207
    %p214 = scmp.eq.s32.totalorder %s24, 1
    %p215 = por %p213, %p214
    %p216 = scmp.ne.s32.totalorder %s207, %s208
    %p217 = scmp.eq.s32.totalorder %s24, 0
    %p218 = por %p216, %p217
    %p219 = scmp.ne.s32.totalorder %s207, %s208
    %p220 = scmp.eq.s32.totalorder %s25, 1
    %p221 = por %p219, %p220
    %p223 = scmp.ne.s32.totalorder %s208, %s222
    %p224 = scmp.eq.s32.totalorder %s25, 0
    %p225 = por %p223, %p224
    %s227 = sadd.s32 %s226, 1
    %p230 = scmp.eq.s32.totalorder %s19, 1
    %p231 = scmp.ne.s32.totalorder %s226, %s228
    %p232 = scmp.eq.s32.totalorder %s19, 0
    %p233 = por %p231, %p232
    %p234 = scmp.ne.s32.totalorder %s226, %s228
    %p235 = scmp.eq.s32.totalorder %s24, 1
    %p236 = por %p234, %p235
    %p237 = scmp.ne.s32.totalorder %s228, %s229
    %p238 = scmp.eq.s32.totalorder %s24, 0
    %p239 = por %p237, %p238
    %p240 = scmp.ne.s32.totalorder %s228, %s229
    %p241 = scmp.eq.s32.totalorder %s25, 1
    %p242 = por %p240, %p241
    %p244 = scmp.ne.s32.totalorder %s229, %s243
    %p245 = scmp.eq.s32.totalorder %s25, 0
    %p246 = por %p244, %p245
    %s247 = ssub.s32 %s19, %s26
    %p248 = scmp.eq.s32.totalorder %s247, 0
    %s250 = sadd.s32 %s249, 1
    %s251 = scalar_select %p248, %s249, %s250
    %p254 = pneg %p248
    %p255 = scmp.eq.s32.totalorder %s19, 1
    %p256 = por %p254, %p255
    %p257 = scmp.ne.s32.totalorder %s249, %s252
    %p258 = scmp.eq.s32.totalorder %s19, 0
    %p259 = por %p257, %p258
    %p260 = scmp.ne.s32.totalorder %s249, %s252
    %p261 = scmp.eq.s32.totalorder %s24, 1
    %p262 = por %p260, %p261
    %p263 = scmp.ne.s32.totalorder %s252, %s253
    %p264 = scmp.eq.s32.totalorder %s24, 0
    %p265 = por %p263, %p264
    %p266 = scmp.ne.s32.totalorder %s252, %s253
    %p267 = scmp.eq.s32.totalorder %s25, 1
    %p268 = por %p266, %p267
    %p270 = scmp.ne.s32.totalorder %s253, %s269
    %p271 = scmp.eq.s32.totalorder %s25, 0
    %p272 = por %p270, %p271
    %s273 = ssub.s32 %s19, %s26
    %p274 = scmp.eq.s32.totalorder %s273, 0
    %s276 = sadd.s32 %s275, 1
    %s277 = scalar_select %p274, %s275, %s276
    %p280 = pneg %p274
    %p281 = scmp.eq.s32.totalorder %s19, 1
    %p282 = por %p280, %p281
    %p283 = scmp.ne.s32.totalorder %s275, %s278
    %p284 = scmp.eq.s32.totalorder %s19, 0
    %p285 = por %p283, %p284
    %p286 = scmp.ne.s32.totalorder %s275, %s278
    %p287 = scmp.eq.s32.totalorder %s24, 1
    %p288 = por %p286, %p287
    %p289 = scmp.ne.s32.totalorder %s278, %s279
    %p290 = scmp.eq.s32.totalorder %s24, 0
    %p291 = por %p289, %p290
    %p292 = scmp.ne.s32.totalorder %s278, %s279
    %p293 = scmp.eq.s32.totalorder %s25, 1
    %p294 = por %p292, %p293
    %p296 = scmp.ne.s32.totalorder %s279, %s295
    %p297 = scmp.eq.s32.totalorder %s25, 0
    %p298 = por %p296, %p297
    %p299 = scmp.le.s32.totalorder 1, %s19
    %p300 = scmp.lt.s32.totalorder %s19, 3
    %p301 = pnand %p299, %p300
    %p302 = pneg %p301
    // Predicated region
    $region9: #{reg_aug_mnist_forward.1} parent=5 // pred_check
      _
    $region10: #{reg_aug_mnist_forward.1} parent=5 // pred_check_branch
      %304 = sbr.rel (%p301) target = $region12
    $region11: #{reg_aug_mnist_forward.1} parent=5 // pred_region
      %s305 = ssub.s32 %s19, 1
      // Predicated region
      $region13: #{reg_aug_mnist_forward.1} parent=11 // pred_check
        %p306 = pneg %p40
      $region14: #{reg_aug_mnist_forward.1} parent=11 // pred_check_branch
        %308 = sbr.rel (%p306) target = $region16
      $region15: #{reg_aug_mnist_forward.1} parent=11 // pred_region
        _
      $region16: #{reg_aug_mnist_forward.1} parent=11 // pred_fallthru
        _
      // Predicated region
      $region17: #{reg_aug_mnist_forward.1} parent=11 // pred_check
        %p309 = pneg %p113
      $region18: #{reg_aug_mnist_forward.1} parent=11 // pred_check_branch
        %311 = sbr.rel (%p309) target = $region20
      $region19: #{reg_aug_mnist_forward.1} parent=11 // pred_region
        _
      $region20: #{reg_aug_mnist_forward.1} parent=11 // pred_fallthru
        _
      // Predicated region
      $region21: #{reg_aug_mnist_forward.1} parent=11 // pred_check
        %p312 = pneg %p134
      $region22: #{reg_aug_mnist_forward.1} parent=11 // pred_check_branch
        %314 = sbr.rel (%p312) target = $region24
      $region23: #{reg_aug_mnist_forward.1} parent=11 // pred_region
        _
      $region24: #{reg_aug_mnist_forward.1} parent=11 // pred_fallthru
        _
      // Predicated region
      $region25: #{reg_aug_mnist_forward.1} parent=11 // pred_check
        %p315 = pneg %p155
      $region26: #{reg_aug_mnist_forward.1} parent=11 // pred_check_branch
        %317 = sbr.rel (%p315) target = $region28
      $region27: #{reg_aug_mnist_forward.1} parent=11 // pred_region
        _
      $region28: #{reg_aug_mnist_forward.1} parent=11 // pred_fallthru
        _
      // Predicated region
      $region29: #{reg_aug_mnist_forward.1} parent=11 // pred_check
        %p318 = pneg %p176
      $region30: #{reg_aug_mnist_forward.1} parent=11 // pred_check_branch
        %320 = sbr.rel (%p318) target = $region32
      $region31: #{reg_aug_mnist_forward.1} parent=11 // pred_region
        _
      $region32: #{reg_aug_mnist_forward.1} parent=11 // pred_fallthru
        _
      // Predicated region
      $region33: #{reg_aug_mnist_forward.1} parent=11 // pred_check
        %p321 = pneg %p197
      $region34: #{reg_aug_mnist_forward.1} parent=11 // pred_check_branch
        %323 = sbr.rel (%p321) target = $region36
      $region35: #{reg_aug_mnist_forward.1} parent=11 // pred_region
        _
      $region36: #{reg_aug_mnist_forward.1} parent=11 // pred_fallthru
        _
      // Predicated region
      $region37: #{reg_aug_mnist_forward.1} parent=11 // pred_check
        %p324 = pneg %p218
      $region38: #{reg_aug_mnist_forward.1} parent=11 // pred_check_branch
        %326 = sbr.rel (%p324) target = $region40
      $region39: #{reg_aug_mnist_forward.1} parent=11 // pred_region
        _
      $region40: #{reg_aug_mnist_forward.1} parent=11 // pred_fallthru
        _
      // Predicated region
      $region41: #{reg_aug_mnist_forward.1} parent=11 // pred_check
        %p327 = pneg %p239
      $region42: #{reg_aug_mnist_forward.1} parent=11 // pred_check_branch
        %329 = sbr.rel (%p327) target = $region44
      $region43: #{reg_aug_mnist_forward.1} parent=11 // pred_region
        _
      $region44: #{reg_aug_mnist_forward.1} parent=11 // pred_fallthru
        _
    $region12: #{reg_aug_mnist_forward.1} parent=5 // pred_fallthru
      _
    %p330 = scmp.lt.s32.totalorder %s19, 2
    // Predicated region
    $region45: #{reg_aug_mnist_forward.1} parent=5 // pred_check
      %p331 = pneg %p330
    $region46: #{reg_aug_mnist_forward.1} parent=5 // pred_check_branch
      %333 = sbr.rel (%p331) target = $region48
    $region47: #{reg_aug_mnist_forward.1} parent=5 // pred_region
      // Predicated region
      $region49: #{reg_aug_mnist_forward.1} parent=47 // pred_check
        %p334 = pneg %p60
      $region50: #{reg_aug_mnist_forward.1} parent=47 // pred_check_branch
        %336 = sbr.rel (%p334) target = $region52
      $region51: #{reg_aug_mnist_forward.1} parent=47 // pred_region
        %s337 = smul.u32 32, %s19
        %p338 = scmp.lt.s32.totalorder %s337, 63
        %s339 = scalar_select %p338, %s337, 63
        %s340 = smul.addr %s339, 2
        %s341 = smul.addr %s340, 4
        %s342 = scalar_lea.vmem %s1, %s341
        %s343 = smul.u32 32, %s19
      $region52: #{reg_aug_mnist_forward.1} parent=47 // pred_fallthru
        _
      // Predicated region
      $region53: #{reg_aug_mnist_forward.1} parent=47 // pred_check
        %p344 = pneg %p86
      $region54: #{reg_aug_mnist_forward.1} parent=47 // pred_check_branch
        %346 = sbr.rel (%p344) target = $region56
      $region55: #{reg_aug_mnist_forward.1} parent=47 // pred_region
        %s347 = smul.u32 32, %s19
        %p348 = scmp.lt.s32.totalorder %s347, 63
        %s349 = scalar_select %p348, %s347, 63
        %s350 = smul.addr %s349, 2
        %s351 = smul.addr %s350, 4
        %s352 = scalar_lea.vmem %s2, %s351
        %s353 = smul.u32 32, %s19
      $region56: #{reg_aug_mnist_forward.1} parent=47 // pred_fallthru
        _
    $region48: #{reg_aug_mnist_forward.1} parent=5 // pred_fallthru
      _
    %p354 = scmp.le.s32.totalorder 1, %s19
    %p355 = scmp.lt.s32.totalorder %s19, 3
    %p356 = pnand %p354, %p355
    %p357 = pneg %p356
    // Predicated region
    $region57: #{reg_aug_mnist_forward.1} parent=5 // pred_check
      _
    $region58: #{reg_aug_mnist_forward.1} parent=5 // pred_check_branch
      %359 = sbr.rel (%p356) target = $region60
    $region59: #{reg_aug_mnist_forward.1} parent=5 // pred_region
      %s360 = ssub.s32 %s19, 1
      %p361 = pneg %p40
      %p362 = pneg %p37
      %s363 = smul.u32 32, %s24
      %p364 = scmp.lt.s32.totalorder %s363, 63
      %s365 = scalar_select %p364, %s363, 63
      %s366 = smul.addr %s365, 2
      %s367 = smul.addr %s366, 4
      %s368 = scalar_lea.vmem %s1, %s367
      %p369 = pneg %p66
      %p370 = pneg %p63
      %s371 = smul.u32 32, %s24
      %p372 = scmp.lt.s32.totalorder %s371, 63
      %s373 = scalar_select %p372, %s371, 63
      %s374 = smul.addr %s373, 2
      %s375 = smul.addr %s374, 4
      %s376 = scalar_lea.vmem %s2, %s375
      %p377 = pneg %p92
      %p378 = pneg %p89
      %p379 = pneg %p113
      %p380 = pneg %p110
      %p381 = pneg %p134
      %p382 = pneg %p131
      %p383 = pneg %p155
      %p384 = pneg %p152
      %p385 = pneg %p176
      %p386 = pneg %p173
      %p387 = pneg %p197
      %p388 = pneg %p194
      %p389 = pneg %p218
      %p390 = pneg %p215
      %p391 = pneg %p239
      %p392 = pneg %p236
      %p393 = pneg %p265
      %p394 = pneg %p262
      %s395 = smul.u32 32, %s24
      %p396 = scmp.lt.s32.totalorder %s395, 63
      %s397 = scalar_select %p396, %s395, 63
      %s398 = smul.addr %s397, 2
      %s399 = smul.addr %s398, 8
      %s400 = scalar_lea.vmem %s10, %s399
      %p401 = pneg %p291
      %p402 = pneg %p288
      %s403 = smul.u32 32, %s24
      %p404 = scmp.lt.s32.totalorder %s403, 63
      %s405 = scalar_select %p404, %s403, 63
      %s406 = smul.addr %s405, 8
      %s407 = scalar_lea.vmem %s11, %s406
      %s408 = smul.u32 32, %s24
      %p409 = scmp.lt.s32.totalorder %s408, 63
      %s410 = scalar_select %p409, %s408, 63
      %s411 = smul.addr %s410, 2
      %s412 = smul.addr %s411, 4
      %s413 = scalar_lea.vmem %s1, %s412
      %s414 = smul.u32 32, %s24
      %s415 = smul.u32 32, %s24
      %p416 = scmp.lt.s32.totalorder %s415, 63
      %s417 = scalar_select %p416, %s415, 63
      %s418 = smul.addr %s417, 2
      %s419 = smul.addr %s418, 4
      %s420 = scalar_lea.vmem %s2, %s419
      %s421 = smul.u32 32, %s24
      %s422 = smul.u32 32, %s24
      %p423 = scmp.lt.s32.totalorder %s422, 63
      %s424 = scalar_select %p423, %s422, 63
      %s425 = smul.addr %s424, 2
      %s426 = smul.addr %s425, 8
      %s427 = scalar_lea.vmem %s10, %s426
      %s428 = smul.u32 32, %s24
      %s429 = smul.u32 32, %s24
      %p430 = scmp.lt.s32.totalorder %s429, 63
      %s431 = scalar_select %p430, %s429, 63
      %s432 = smul.addr %s431, 8
      %s433 = scalar_lea.vmem %s11, %s432
      %s434 = smul.u32 32, %s24
      %s436 = sld [smem:[#allocation2]]
      %v437 = vld [vmem:[%s413] sm:$0xff]
      %v438 = vld [vmem:[%s413 + $0x8] sm:$0xff]
      %v439 = vld [vmem:[%s413 + $0x10] sm:$0xff]
      %v440 = vld [vmem:[%s413 + $0x18] sm:$0xff]
      %v441 = vld [vmem:[%s413 + $0x20] sm:$0xff]
      %v442 = vld [vmem:[%s413 + $0x28] sm:$0xff]
      %v443 = vld [vmem:[%s413 + $0x30] sm:$0xff]
      %v444 = vld [vmem:[%s413 + $0x38] sm:$0xff]
      %v445 = vld [vmem:[%s413 + $0x40] sm:$0xff]
      %v446 = vld [vmem:[%s413 + $0x48] sm:$0xff]
      %v447 = vld [vmem:[%s413 + $0x50] sm:$0xff]
      %v448 = vld [vmem:[%s413 + $0x58] sm:$0xff]
      %v449 = vld [vmem:[%s413 + $0x60] sm:$0xff]
      %v450 = vld [vmem:[%s413 + $0x68] sm:$0xff]
      %v451 = vld [vmem:[%s413 + $0x70] sm:$0xff]
      %v452 = vld [vmem:[%s413 + $0x78] sm:$0xff]
      %v453 = vld [vmem:[%s413 + $0x80] sm:$0xff]
      %v454 = vld [vmem:[%s413 + $0x88] sm:$0xff]
      %v455 = vld [vmem:[%s413 + $0x90] sm:$0xff]
      %v456 = vld [vmem:[%s413 + $0x98] sm:$0xff]
      %v457 = vld [vmem:[%s413 + $0xa0] sm:$0xff]
      %v458 = vld [vmem:[%s413 + $0xa8] sm:$0xff]
      %v459 = vld [vmem:[%s413 + $0xb0] sm:$0xff]
      %v460 = vld [vmem:[%s413 + $0xb8] sm:$0xff]
      %v461 = vld [vmem:[%s413 + $0xc0] sm:$0xff]
      %v462 = vld [vmem:[%s413 + $0xc8] sm:$0xff]
      %v463 = vld [vmem:[%s413 + $0xd0] sm:$0xff]
      %v464 = vld [vmem:[%s413 + $0xd8] sm:$0xff]
      %v465 = vld [vmem:[%s413 + $0xe0] sm:$0xff]
      %v466 = vld [vmem:[%s413 + $0xe8] sm:$0xff]
      %v467 = vld [vmem:[%s413 + $0xf0] sm:$0xff]
      %v468 = vld [vmem:[%s413 + $0xf8] sm:$0xff]
      %v469 = vld [vmem:[%s420] sm:$0xff]
      %v470 = vld [vmem:[%s420 + $0x8] sm:$0xff]
      %v471 = vld [vmem:[%s420 + $0x10] sm:$0xff]
      %v472 = vld [vmem:[%s420 + $0x18] sm:$0xff]
      %v473 = vld [vmem:[%s420 + $0x20] sm:$0xff]
      %v474 = vld [vmem:[%s420 + $0x28] sm:$0xff]
      %v475 = vld [vmem:[%s420 + $0x30] sm:$0xff]
      %v476 = vld [vmem:[%s420 + $0x38] sm:$0xff]
      %v477 = vld [vmem:[%s420 + $0x40] sm:$0xff]
      %v478 = vld [vmem:[%s420 + $0x48] sm:$0xff]
      %v479 = vld [vmem:[%s420 + $0x50] sm:$0xff]
      %v480 = vld [vmem:[%s420 + $0x58] sm:$0xff]
      %v481 = vld [vmem:[%s420 + $0x60] sm:$0xff]
      %v482 = vld [vmem:[%s420 + $0x68] sm:$0xff]
      %v483 = vld [vmem:[%s420 + $0x70] sm:$0xff]
      %v484 = vld [vmem:[%s420 + $0x78] sm:$0xff]
      %v485 = vld [vmem:[%s420 + $0x80] sm:$0xff]
      %v486 = vld [vmem:[%s420 + $0x88] sm:$0xff]
      %v487 = vld [vmem:[%s420 + $0x90] sm:$0xff]
      %v488 = vld [vmem:[%s420 + $0x98] sm:$0xff]
      %v489 = vld [vmem:[%s420 + $0xa0] sm:$0xff]
      %v490 = vld [vmem:[%s420 + $0xa8] sm:$0xff]
      %v491 = vld [vmem:[%s420 + $0xb0] sm:$0xff]
      %v492 = vld [vmem:[%s420 + $0xb8] sm:$0xff]
      %v493 = vld [vmem:[%s420 + $0xc0] sm:$0xff]
      %v494 = vld [vmem:[%s420 + $0xc8] sm:$0xff]
      %v495 = vld [vmem:[%s420 + $0xd0] sm:$0xff]
      %v496 = vld [vmem:[%s420 + $0xd8] sm:$0xff]
      %v497 = vld [vmem:[%s420 + $0xe0] sm:$0xff]
      %v498 = vld [vmem:[%s420 + $0xe8] sm:$0xff]
      %v499 = vld [vmem:[%s420 + $0xf0] sm:$0xff]
      %v500 = vld [vmem:[%s420 + $0xf8] sm:$0xff]
      %v501 = vld [vmem:[%s3] sm:$0xf]
      %v502 = vld [vmem:[%s3 + $0x4] sm:$0xf]
      %v503 = vld [vmem:[%s3 + $0x8] sm:$0xf]
      %v504 = vld [vmem:[%s3 + $0xc] sm:$0xf]
      %v505 = vld [vmem:[%s3 + $0x10] sm:$0xf]
      %v506 = vld [vmem:[%s3 + $0x14] sm:$0xf]
      %v507 = vld [vmem:[%s3 + $0x18] sm:$0xf]
      %v508 = vld [vmem:[%s3 + $0x1c] sm:$0xf]
      %v509 = vld [vmem:[%s3 + $0x20] sm:$0xf]
      %v510 = vld [vmem:[%s3 + $0x24] sm:$0xf]
      %v511 = vld [vmem:[%s3 + $0x28] sm:$0xf]
      %v512 = vld [vmem:[%s3 + $0x2c] sm:$0xf]
      %v513 = vld [vmem:[%s3 + $0x30] sm:$0xf]
      %v514 = vld [vmem:[%s3 + $0x34] sm:$0xf]
      %v515 = vld [vmem:[%s3 + $0x38] sm:$0xf]
      %v516 = vld [vmem:[%s3 + $0x3c] sm:$0xf]
      %v517 = vld [vmem:[%s3 + $0x40] sm:$0xf]
      %v518 = vld [vmem:[%s3 + $0x44] sm:$0xf]
      %v519 = vld [vmem:[%s3 + $0x48] sm:$0xf]
      %v520 = vld [vmem:[%s3 + $0x4c] sm:$0xf]
      %v521 = vld [vmem:[%s3 + $0x50] sm:$0xf]
      %v522 = vld [vmem:[%s3 + $0x54] sm:$0xf]
      %v523 = vld [vmem:[%s3 + $0x58] sm:$0xf]
      %v524 = vld [vmem:[%s3 + $0x5c] sm:$0xf]
      %v525 = vld [vmem:[%s3 + $0x60] sm:$0xf]
      %v526 = vld [vmem:[%s3 + $0x64] sm:$0xf]
      %v527 = vld [vmem:[%s3 + $0x68] sm:$0xf]
      %v528 = vld [vmem:[%s3 + $0x6c] sm:$0xf]
      %v529 = vld [vmem:[%s3 + $0x70] sm:$0xf]
      %v530 = vld [vmem:[%s3 + $0x74] sm:$0xf]
      %v531 = vld [vmem:[%s3 + $0x78] sm:$0xf]
      %v532 = vld [vmem:[%s3 + $0x7c] sm:$0xf]
      %v533 = vld [vmem:[%s4] sm:$0x1]
      %v535 = vlaneseq
      %v536 = vshrl.u32 %v535, 7
      %v537 = vsub.s32 0, %v536
      %v538 = vrot.slane %v533, %v537
      %v572 = vunpack.c.l.b16 %v437
      %v573 = vunpack.c.h.b16 %v437
      %v574 = vunpack.c.l.b16 %v438
      %v575 = vunpack.c.h.b16 %v438
      %v576 = vunpack.c.l.b16 %v439
      %v577 = vunpack.c.h.b16 %v439
      %v578 = vunpack.c.l.b16 %v440
      %v579 = vunpack.c.h.b16 %v440
      %v580 = vunpack.c.l.b16 %v441
      %v581 = vunpack.c.h.b16 %v441
      %v582 = vunpack.c.l.b16 %v442
      %v583 = vunpack.c.h.b16 %v442
      %v584 = vunpack.c.l.b16 %v443
      %v585 = vunpack.c.h.b16 %v443
      %v586 = vunpack.c.l.b16 %v444
      %v587 = vunpack.c.h.b16 %v444
      %v588 = vunpack.c.l.b16 %v445
      %v589 = vunpack.c.h.b16 %v445
      %v590 = vunpack.c.l.b16 %v446
      %v591 = vunpack.c.h.b16 %v446
      %v592 = vunpack.c.l.b16 %v447
      %v593 = vunpack.c.h.b16 %v447
      %v594 = vunpack.c.l.b16 %v448
      %v595 = vunpack.c.h.b16 %v448
      %v596 = vunpack.c.l.b16 %v449
      %v597 = vunpack.c.h.b16 %v449
      %v598 = vunpack.c.l.b16 %v450
      %v599 = vunpack.c.h.b16 %v450
      %v600 = vunpack.c.l.b16 %v451
      %v601 = vunpack.c.h.b16 %v451
      %v602 = vunpack.c.l.b16 %v452
      %v603 = vunpack.c.h.b16 %v452
      %v604 = vunpack.c.l.b16 %v453
      %v605 = vunpack.c.h.b16 %v453
      %v606 = vunpack.c.l.b16 %v454
      %v607 = vunpack.c.h.b16 %v454
      %v608 = vunpack.c.l.b16 %v455
      %v609 = vunpack.c.h.b16 %v455
      %v610 = vunpack.c.l.b16 %v456
      %v611 = vunpack.c.h.b16 %v456
      %v612 = vunpack.c.l.b16 %v457
      %v613 = vunpack.c.h.b16 %v457
      %v614 = vunpack.c.l.b16 %v458
      %v615 = vunpack.c.h.b16 %v458
      %v616 = vunpack.c.l.b16 %v459
      %v617 = vunpack.c.h.b16 %v459
      %v618 = vunpack.c.l.b16 %v460
      %v619 = vunpack.c.h.b16 %v460
      %v620 = vunpack.c.l.b16 %v461
      %v621 = vunpack.c.h.b16 %v461
      %v622 = vunpack.c.l.b16 %v462
      %v623 = vunpack.c.h.b16 %v462
      %v624 = vunpack.c.l.b16 %v463
      %v625 = vunpack.c.h.b16 %v463
      %v626 = vunpack.c.l.b16 %v464
      %v627 = vunpack.c.h.b16 %v464
      %v628 = vunpack.c.l.b16 %v465
      %v629 = vunpack.c.h.b16 %v465
      %v630 = vunpack.c.l.b16 %v466
      %v631 = vunpack.c.h.b16 %v466
      %v632 = vunpack.c.l.b16 %v467
      %v633 = vunpack.c.h.b16 %v467
      %v634 = vunpack.c.l.b16 %v468
      %v635 = vunpack.c.h.b16 %v468
      %v636 = vpack.c.b16 %v574, %v572
      %v637 = vpack.c.b16 %v575, %v573
      %v638 = vpack.c.b16 %v578, %v576
      %v639 = vpack.c.b16 %v579, %v577
      %v640 = vpack.c.b16 %v582, %v580
      %v641 = vpack.c.b16 %v583, %v581
      %v642 = vpack.c.b16 %v586, %v584
      %v643 = vpack.c.b16 %v587, %v585
      %v644 = vpack.c.b16 %v590, %v588
      %v645 = vpack.c.b16 %v591, %v589
      %v646 = vpack.c.b16 %v594, %v592
      %v647 = vpack.c.b16 %v595, %v593
      %v648 = vpack.c.b16 %v598, %v596
      %v649 = vpack.c.b16 %v599, %v597
      %v650 = vpack.c.b16 %v602, %v600
      %v651 = vpack.c.b16 %v603, %v601
      %v652 = vpack.c.b16 %v606, %v604
      %v653 = vpack.c.b16 %v607, %v605
      %v654 = vpack.c.b16 %v610, %v608
      %v655 = vpack.c.b16 %v611, %v609
      %v656 = vpack.c.b16 %v614, %v612
      %v657 = vpack.c.b16 %v615, %v613
      %v658 = vpack.c.b16 %v618, %v616
      %v659 = vpack.c.b16 %v619, %v617
      %v660 = vpack.c.b16 %v622, %v620
      %v661 = vpack.c.b16 %v623, %v621
      %v662 = vpack.c.b16 %v626, %v624
      %v663 = vpack.c.b16 %v627, %v625
      %v664 = vpack.c.b16 %v630, %v628
      %v665 = vpack.c.b16 %v631, %v629
      %v666 = vpack.c.b16 %v634, %v632
      %v667 = vpack.c.b16 %v635, %v633
      %v732 = vunpack.c.l.b16 %v501
      %v733 = vunpack.c.l.b16 %v502
      %v734 = vunpack.c.l.b16 %v503
      %v735 = vunpack.c.l.b16 %v504
      %v736 = vunpack.c.l.b16 %v505
      %v737 = vunpack.c.l.b16 %v506
      %v738 = vunpack.c.l.b16 %v507
      %v739 = vunpack.c.l.b16 %v508
      %v740 = vunpack.c.l.b16 %v509
      %v741 = vunpack.c.l.b16 %v510
      %v742 = vunpack.c.l.b16 %v511
      %v743 = vunpack.c.l.b16 %v512
      %v744 = vunpack.c.l.b16 %v513
      %v745 = vunpack.c.l.b16 %v514
      %v746 = vunpack.c.l.b16 %v515
      %v747 = vunpack.c.l.b16 %v516
      %v748 = vunpack.c.l.b16 %v517
      %v749 = vunpack.c.l.b16 %v518
      %v750 = vunpack.c.l.b16 %v519
      %v751 = vunpack.c.l.b16 %v520
      %v752 = vunpack.c.l.b16 %v521
      %v753 = vunpack.c.l.b16 %v522
      %v754 = vunpack.c.l.b16 %v523
      %v755 = vunpack.c.l.b16 %v524
      %v756 = vunpack.c.l.b16 %v525
      %v757 = vunpack.c.l.b16 %v526
      %v758 = vunpack.c.l.b16 %v527
      %v759 = vunpack.c.l.b16 %v528
      %v760 = vunpack.c.l.b16 %v529
      %v761 = vunpack.c.l.b16 %v530
      %v762 = vunpack.c.l.b16 %v531
      %v763 = vunpack.c.l.b16 %v532
      %v764 = vpack.c.b16 %v733, %v732
      %v765 = vpack.c.b16 %v735, %v734
      %v766 = vpack.c.b16 %v737, %v736
      %v767 = vpack.c.b16 %v739, %v738
      %v768 = vpack.c.b16 %v741, %v740
      %v769 = vpack.c.b16 %v743, %v742
      %v770 = vpack.c.b16 %v745, %v744
      %v771 = vpack.c.b16 %v747, %v746
      %v772 = vpack.c.b16 %v749, %v748
      %v773 = vpack.c.b16 %v751, %v750
      %v774 = vpack.c.b16 %v753, %v752
      %v775 = vpack.c.b16 %v755, %v754
      %v776 = vpack.c.b16 %v757, %v756
      %v777 = vpack.c.b16 %v759, %v758
      %v778 = vpack.c.b16 %v761, %v760
      %v779 = vpack.c.b16 %v763, %v762
      %796 = vmatprep.subr.bf16.mxu0 0
      %797 = vmatpush1.bf16.msra.mxu0 %v764
      %798 = vmatprep.subr.bf16.mxu0 0
      %799 = vmatpush1.bf16.msra.mxu0 %v765
      %800 = vmatprep.subr.bf16.mxu0 0
      %801 = vmatpush1.bf16.msra.mxu0 %v766
      %802 = vmatprep.subr.bf16.mxu0 0
      %803 = vmatpush1.bf16.msra.mxu0 %v767
      %804 = vmatprep.subr.bf16.mxu0 0
      %805 = vmatpush1.bf16.msra.mxu0 %v768
      %806 = vmatprep.subr.bf16.mxu0 0
      %807 = vmatpush1.bf16.msra.mxu0 %v769
      %808 = vmatprep.subr.bf16.mxu0 0
      %809 = vmatpush1.bf16.msra.mxu0 %v770
      %810 = vmatprep.subr.bf16.mxu0 0
      %811 = vmatpush1.bf16.msra.mxu0 %v771
      %812 = vmatprep.subr.bf16.mxu0 0
      %813 = vmatpush1.bf16.msra.mxu0 %v772
      %814 = vmatprep.subr.bf16.mxu0 0
      %815 = vmatpush1.bf16.msra.mxu0 %v773
      %816 = vmatprep.subr.bf16.mxu0 0
      %817 = vmatpush1.bf16.msra.mxu0 %v774
      %818 = vmatprep.subr.bf16.mxu0 0
      %819 = vmatpush1.bf16.msra.mxu0 %v775
      %820 = vmatprep.subr.bf16.mxu0 0
      %821 = vmatpush1.bf16.msra.mxu0 %v776
      %822 = vmatprep.subr.bf16.mxu0 0
      %823 = vmatpush1.bf16.msra.mxu0 %v777
      %824 = vmatprep.subr.bf16.mxu0 0
      %825 = vmatpush1.bf16.msra.mxu0 %v778
      %826 = vmatprep.subr.bf16.mxu0 0
      %827 = vmatpush1.bf16.msra.mxu0 %v779
      %828 = vmatprep.mubr.bf16.mxu0 %v637
      %829 = vmatmul.mubr.bf16.gmra.mrb[0].mxu0 %v636
      %v830 = vpop.f32.mrb[0].mxu0
      %v831 = vadd.f32 %v538, %v830
      %v832 = vpop.f32.mrb[0].mxu0
      %v833 = vpop.f32.mrb[0].mxu0
      %v834 = vadd.f32 %v538, %v833
      %v835 = vpop.f32.mrb[0].mxu0
      %836 = vmatprep.mubr.bf16.mxu0 %v639
      %837 = vmatmul.mubr.bf16.gmra.mrb[0].mxu0 %v638
      %v838 = vpop.f32.mrb[0].mxu0
      %v839 = vadd.f32 %v538, %v838
      %v840 = vpop.f32.mrb[0].mxu0
      %v841 = vpop.f32.mrb[0].mxu0
      %v842 = vadd.f32 %v538, %v841
      %v843 = vpop.f32.mrb[0].mxu0
      %844 = vmatprep.mubr.bf16.mxu0 %v641
      %845 = vmatmul.mubr.bf16.gmra.mrb[0].mxu0 %v640
      %v846 = vpop.f32.mrb[0].mxu0
      %v847 = vadd.f32 %v538, %v846
      %v848 = vpop.f32.mrb[0].mxu0
      %v849 = vpop.f32.mrb[0].mxu0
      %v850 = vadd.f32 %v538, %v849
      %v851 = vpop.f32.mrb[0].mxu0
      %852 = vmatprep.mubr.bf16.mxu0 %v643
      %853 = vmatmul.mubr.bf16.gmra.mrb[0].mxu0 %v642
      %v854 = vpop.f32.mrb[0].mxu0
      %v855 = vadd.f32 %v538, %v854
      %v856 = vpop.f32.mrb[0].mxu0
      %v857 = vpop.f32.mrb[0].mxu0
      %v858 = vadd.f32 %v538, %v857
      %v859 = vpop.f32.mrb[0].mxu0
      %860 = vmatprep.mubr.bf16.mxu0 %v645
      %861 = vmatmul.mubr.bf16.gmra.mrb[0].mxu0 %v644
      %v862 = vpop.f32.mrb[0].mxu0
      %v863 = vadd.f32 %v538, %v862
      %v864 = vpop.f32.mrb[0].mxu0
      %v865 = vpop.f32.mrb[0].mxu0
      %v866 = vadd.f32 %v538, %v865
      %v867 = vpop.f32.mrb[0].mxu0
      %868 = vmatprep.mubr.bf16.mxu0 %v647
      %869 = vmatmul.mubr.bf16.gmra.mrb[0].mxu0 %v646
      %v870 = vpop.f32.mrb[0].mxu0
      %v871 = vadd.f32 %v538, %v870
      %v872 = vpop.f32.mrb[0].mxu0
      %v873 = vpop.f32.mrb[0].mxu0
      %v874 = vadd.f32 %v538, %v873
      %v875 = vpop.f32.mrb[0].mxu0
      %876 = vmatprep.mubr.bf16.mxu0 %v649
      %877 = vmatmul.mubr.bf16.gmra.mrb[0].mxu0 %v648
      %v878 = vpop.f32.mrb[0].mxu0
      %v879 = vadd.f32 %v538, %v878
      %v880 = vpop.f32.mrb[0].mxu0
      %v881 = vpop.f32.mrb[0].mxu0
      %v882 = vadd.f32 %v538, %v881
      %v883 = vpop.f32.mrb[0].mxu0
      %884 = vmatprep.mubr.bf16.mxu0 %v651
      %885 = vmatmul.mubr.bf16.gmra.mrb[0].mxu0 %v650
      %v886 = vpop.f32.mrb[0].mxu0
      %v887 = vadd.f32 %v538, %v886
      %v888 = vpop.f32.mrb[0].mxu0
      %v889 = vpop.f32.mrb[0].mxu0
      %v890 = vadd.f32 %v538, %v889
      %v891 = vpop.f32.mrb[0].mxu0
      %892 = vmatprep.mubr.bf16.mxu0 %v653
      %893 = vmatmul.mubr.bf16.gmra.mrb[0].mxu0 %v652
      %v894 = vpop.f32.mrb[0].mxu0
      %v895 = vadd.f32 %v538, %v894
      %v896 = vpop.f32.mrb[0].mxu0
      %v897 = vpop.f32.mrb[0].mxu0
      %v898 = vadd.f32 %v538, %v897
      %v899 = vpop.f32.mrb[0].mxu0
      %900 = vmatprep.mubr.bf16.mxu0 %v655
      %901 = vmatmul.mubr.bf16.gmra.mrb[0].mxu0 %v654
      %v902 = vpop.f32.mrb[0].mxu0
      %v903 = vadd.f32 %v538, %v902
      %v904 = vpop.f32.mrb[0].mxu0
      %v905 = vpop.f32.mrb[0].mxu0
      %v906 = vadd.f32 %v538, %v905
      %v907 = vpop.f32.mrb[0].mxu0
      %908 = vmatprep.mubr.bf16.mxu0 %v657
      %909 = vmatmul.mubr.bf16.gmra.mrb[0].mxu0 %v656
      %v910 = vpop.f32.mrb[0].mxu0
      %v911 = vadd.f32 %v538, %v910
      %v912 = vpop.f32.mrb[0].mxu0
      %v913 = vpop.f32.mrb[0].mxu0
      %v914 = vadd.f32 %v538, %v913
      %v915 = vpop.f32.mrb[0].mxu0
      %916 = vmatprep.mubr.bf16.mxu0 %v659
      %917 = vmatmul.mubr.bf16.gmra.mrb[0].mxu0 %v658
      %v918 = vpop.f32.mrb[0].mxu0
      %v919 = vadd.f32 %v538, %v918
      %v920 = vpop.f32.mrb[0].mxu0
      %v921 = vpop.f32.mrb[0].mxu0
      %v922 = vadd.f32 %v538, %v921
      %v923 = vpop.f32.mrb[0].mxu0
      %924 = vmatprep.mubr.bf16.mxu0 %v661
      %925 = vmatmul.mubr.bf16.gmra.mrb[0].mxu0 %v660
      %v926 = vpop.f32.mrb[0].mxu0
      %v927 = vadd.f32 %v538, %v926
      %v928 = vpop.f32.mrb[0].mxu0
      %v929 = vpop.f32.mrb[0].mxu0
      %v930 = vadd.f32 %v538, %v929
      %v931 = vpop.f32.mrb[0].mxu0
      %932 = vmatprep.mubr.bf16.mxu0 %v663
      %933 = vmatmul.mubr.bf16.gmra.mrb[0].mxu0 %v662
      %v934 = vpop.f32.mrb[0].mxu0
      %v935 = vadd.f32 %v538, %v934
      %v936 = vpop.f32.mrb[0].mxu0
      %v937 = vpop.f32.mrb[0].mxu0
      %v938 = vadd.f32 %v538, %v937
      %v939 = vpop.f32.mrb[0].mxu0
      %940 = vmatprep.mubr.bf16.mxu0 %v665
      %941 = vmatmul.mubr.bf16.gmra.mrb[0].mxu0 %v664
      %v942 = vpop.f32.mrb[0].mxu0
      %v943 = vadd.f32 %v538, %v942
      %v944 = vpop.f32.mrb[0].mxu0
      %v945 = vpop.f32.mrb[0].mxu0
      %v946 = vadd.f32 %v538, %v945
      %v947 = vpop.f32.mrb[0].mxu0
      %948 = vmatprep.mubr.bf16.mxu0 %v667
      %949 = vmatmul.mubr.bf16.gmra.mrb[0].mxu0 %v666
      %v950 = vpop.f32.mrb[0].mxu0
      %v951 = vadd.f32 %v538, %v950
      %v952 = vpop.f32.mrb[0].mxu0
      %v953 = vpop.f32.mrb[0].mxu0
      %v954 = vadd.f32 %v538, %v953
      %v955 = vpop.f32.mrb[0].mxu0
      %956 = vdwg.mxu0
      %v957 = vld [vmem:[%s5] sm:$0x1]
      %v958 = vstv %s436
      %v959 = vmul.f32 %v958, %v957
      %v961 = vlaneseq
      %v962 = vshrl.u32 %v961, 7
      %v963 = vsub.s32 0, %v962
      %v964 = vrot.slane %v959, %v963
      %v966 = vadd.f32 %v831, %v964
      %v967 = vadd.f32 %v834, %v964
      %v968 = vadd.f32 %v839, %v964
      %v969 = vadd.f32 %v842, %v964
      %v970 = vadd.f32 %v847, %v964
      %v971 = vadd.f32 %v850, %v964
      %v972 = vadd.f32 %v855, %v964
      %v973 = vadd.f32 %v858, %v964
      %v974 = vadd.f32 %v863, %v964
      %v975 = vadd.f32 %v866, %v964
      %v976 = vadd.f32 %v871, %v964
      %v977 = vadd.f32 %v874, %v964
      %v978 = vadd.f32 %v879, %v964
      %v979 = vadd.f32 %v882, %v964
      %v980 = vadd.f32 %v887, %v964
      %v981 = vadd.f32 %v890, %v964
      %v982 = vadd.f32 %v895, %v964
      %v983 = vadd.f32 %v898, %v964
      %v984 = vadd.f32 %v903, %v964
      %v985 = vadd.f32 %v906, %v964
      %v986 = vadd.f32 %v911, %v964
      %v987 = vadd.f32 %v914, %v964
      %v988 = vadd.f32 %v919, %v964
      %v989 = vadd.f32 %v922, %v964
      %v990 = vadd.f32 %v927, %v964
      %v991 = vadd.f32 %v930, %v964
      %v992 = vadd.f32 %v935, %v964
      %v993 = vadd.f32 %v938, %v964
      %v994 = vadd.f32 %v943, %v964
      %v995 = vadd.f32 %v946, %v964
      %v996 = vadd.f32 %v951, %v964
      %v997 = vadd.f32 %v954, %v964
      %v998 = vtanh.pop %v966
      %v999 = vtanh.pop %v967
      %v1000 = vtanh.pop %v968
      %v1001 = vtanh.pop %v969
      %v1002 = vtanh.pop %v970
      %v1003 = vtanh.pop %v971
      %v1004 = vtanh.pop %v972
      %v1005 = vtanh.pop %v973
      %v1006 = vtanh.pop %v974
      %v1007 = vtanh.pop %v975
      %v1008 = vtanh.pop %v976
      %v1009 = vtanh.pop %v977
      %v1010 = vtanh.pop %v978
      %v1011 = vtanh.pop %v979
      %v1012 = vtanh.pop %v980
      %v1013 = vtanh.pop %v981
      %v1014 = vtanh.pop %v982
      %v1015 = vtanh.pop %v983
      %v1016 = vtanh.pop %v984
      %v1017 = vtanh.pop %v985
      %v1018 = vtanh.pop %v986
      %v1019 = vtanh.pop %v987
      %v1020 = vtanh.pop %v988
      %v1021 = vtanh.pop %v989
      %v1022 = vtanh.pop %v990
      %v1023 = vtanh.pop %v991
      %v1024 = vtanh.pop %v992
      %v1025 = vtanh.pop %v993
      %v1026 = vtanh.pop %v994
      %v1027 = vtanh.pop %v995
      %v1028 = vtanh.pop %v996
      %v1029 = vtanh.pop %v997
      %v1030 = vpack.c.bf16 %v999, %v998
      %v1031 = vpack.c.bf16 %v1001, %v1000
      %v1032 = vpack.c.bf16 %v1003, %v1002
      %v1033 = vpack.c.bf16 %v1005, %v1004
      %v1034 = vpack.c.bf16 %v1007, %v1006
      %v1035 = vpack.c.bf16 %v1009, %v1008
      %v1036 = vpack.c.bf16 %v1011, %v1010
      %v1037 = vpack.c.bf16 %v1013, %v1012
      %v1038 = vpack.c.bf16 %v1015, %v1014
      %v1039 = vpack.c.bf16 %v1017, %v1016
      %v1040 = vpack.c.bf16 %v1019, %v1018
      %v1041 = vpack.c.bf16 %v1021, %v1020
      %v1042 = vpack.c.bf16 %v1023, %v1022
      %v1043 = vpack.c.bf16 %v1025, %v1024
      %v1044 = vpack.c.bf16 %v1027, %v1026
      %v1045 = vpack.c.bf16 %v1029, %v1028
      %v1046 = vld [vmem:[%s6] sm:$0xff]
      %v1047 = vld [vmem:[%s6 + $0x8] sm:$0xff]
      %v1048 = vld [vmem:[%s6 + $0x10] sm:$0xff]
      %v1049 = vld [vmem:[%s6 + $0x18] sm:$0xff]
      %v1050 = vld [vmem:[%s6 + $0x20] sm:$0xff]
      %v1051 = vld [vmem:[%s6 + $0x28] sm:$0xff]
      %v1052 = vld [vmem:[%s6 + $0x30] sm:$0xff]
      %v1053 = vld [vmem:[%s6 + $0x38] sm:$0xff]
      %v1054 = vld [vmem:[%s6 + $0x40] sm:$0xff]
      %v1055 = vld [vmem:[%s6 + $0x48] sm:$0xff]
      %v1056 = vld [vmem:[%s6 + $0x50] sm:$0xff]
      %v1057 = vld [vmem:[%s6 + $0x58] sm:$0xff]
      %v1058 = vld [vmem:[%s6 + $0x60] sm:$0xff]
      %v1059 = vld [vmem:[%s6 + $0x68] sm:$0xff]
      %v1060 = vld [vmem:[%s6 + $0x70] sm:$0xff]
      %v1061 = vld [vmem:[%s6 + $0x78] sm:$0xff]
      %v1062 = vld [vmem:[%s7] sm:$0x3]
      %v1064 = vlaneseq
      %v1065 = vshrl.u32 %v1064, 7
      %v1066 = vsub.s32 0, %v1065
      %v1067 = vrot.slane %v1062, %v1066
      %v1068 = vlaneseq
      %v1069 = vshrl.u32 %v1068, 7
      %v1070 = vsub.s32 1, %v1069
      %v1071 = vrot.slane %v1062, %v1070
      %v1090 = vunpack.c.l.b16 %v1046
      %v1091 = vunpack.c.h.b16 %v1046
      %v1092 = vunpack.c.l.b16 %v1047
      %v1093 = vunpack.c.h.b16 %v1047
      %v1094 = vunpack.c.l.b16 %v1048
      %v1095 = vunpack.c.h.b16 %v1048
      %v1096 = vunpack.c.l.b16 %v1049
      %v1097 = vunpack.c.h.b16 %v1049
      %v1098 = vunpack.c.l.b16 %v1050
      %v1099 = vunpack.c.h.b16 %v1050
      %v1100 = vunpack.c.l.b16 %v1051
      %v1101 = vunpack.c.h.b16 %v1051
      %v1102 = vunpack.c.l.b16 %v1052
      %v1103 = vunpack.c.h.b16 %v1052
      %v1104 = vunpack.c.l.b16 %v1053
      %v1105 = vunpack.c.h.b16 %v1053
      %v1106 = vunpack.c.l.b16 %v1054
      %v1107 = vunpack.c.h.b16 %v1054
      %v1108 = vunpack.c.l.b16 %v1055
      %v1109 = vunpack.c.h.b16 %v1055
      %v1110 = vunpack.c.l.b16 %v1056
      %v1111 = vunpack.c.h.b16 %v1056
      %v1112 = vunpack.c.l.b16 %v1057
      %v1113 = vunpack.c.h.b16 %v1057
      %v1114 = vunpack.c.l.b16 %v1058
      %v1115 = vunpack.c.h.b16 %v1058
      %v1116 = vunpack.c.l.b16 %v1059
      %v1117 = vunpack.c.h.b16 %v1059
      %v1118 = vunpack.c.l.b16 %v1060
      %v1119 = vunpack.c.h.b16 %v1060
      %v1120 = vunpack.c.l.b16 %v1061
      %v1121 = vunpack.c.h.b16 %v1061
      %v1122 = vpack.c.b16 %v1092, %v1090
      %v1123 = vpack.c.b16 %v1093, %v1091
      %v1124 = vpack.c.b16 %v1096, %v1094
      %v1125 = vpack.c.b16 %v1097, %v1095
      %v1126 = vpack.c.b16 %v1100, %v1098
      %v1127 = vpack.c.b16 %v1101, %v1099
      %v1128 = vpack.c.b16 %v1104, %v1102
      %v1129 = vpack.c.b16 %v1105, %v1103
      %v1130 = vpack.c.b16 %v1108, %v1106
      %v1131 = vpack.c.b16 %v1109, %v1107
      %v1132 = vpack.c.b16 %v1112, %v1110
      %v1133 = vpack.c.b16 %v1113, %v1111
      %v1134 = vpack.c.b16 %v1116, %v1114
      %v1135 = vpack.c.b16 %v1117, %v1115
      %v1136 = vpack.c.b16 %v1120, %v1118
      %v1137 = vpack.c.b16 %v1121, %v1119
      %1154 = vmatprep.subr.bf16.mxu0 %v1123
      %1155 = vmatpush1.bf16.msra.mxu0 %v1122
      %1156 = vmatprep.subr.bf16.mxu0 %v1125
      %1157 = vmatpush1.bf16.msra.mxu0 %v1124
      %1158 = vmatprep.subr.bf16.mxu0 %v1127
      %1159 = vmatpush1.bf16.msra.mxu0 %v1126
      %1160 = vmatprep.subr.bf16.mxu0 %v1129
      %1161 = vmatpush1.bf16.msra.mxu0 %v1128
      %1162 = vmatprep.subr.bf16.mxu0 %v1131
      %1163 = vmatpush1.bf16.msra.mxu0 %v1130
      %1164 = vmatprep.subr.bf16.mxu0 %v1133
      %1165 = vmatpush1.bf16.msra.mxu0 %v1132
      %1166 = vmatprep.subr.bf16.mxu0 %v1135
      %1167 = vmatpush1.bf16.msra.mxu0 %v1134
      %1168 = vmatprep.subr.bf16.mxu0 %v1137
      %1169 = vmatpush1.bf16.msra.mxu0 %v1136
      %1170 = vmatprep.subr.bf16.mxu0 0
      %1171 = vmatpush1.bf16.msra.mxu0 0
      %1172 = vmatprep.subr.bf16.mxu0 0
      %1173 = vmatpush1.bf16.msra.mxu0 0
      %1174 = vmatprep.subr.bf16.mxu0 0
      %1175 = vmatpush1.bf16.msra.mxu0 0
      %1176 = vmatprep.subr.bf16.mxu0 0
      %1177 = vmatpush1.bf16.msra.mxu0 0
      %1178 = vmatprep.subr.bf16.mxu0 0
      %1179 = vmatpush1.bf16.msra.mxu0 0
      %1180 = vmatprep.subr.bf16.mxu0 0
      %1181 = vmatpush1.bf16.msra.mxu0 0
      %1182 = vmatprep.subr.bf16.mxu0 0
      %1183 = vmatpush1.bf16.msra.mxu0 0
      %1184 = vmatprep.subr.bf16.mxu0 0
      %1185 = vmatpush1.bf16.msra.mxu0 0
      %1186 = vmatprep.mubr.bf16.mxu0 0
      %1187 = vmatmul.mubr.bf16.gmra.mrb[0].mxu0 %v1030
      %v1188 = vpop.f32.mrb[0].mxu0
      %v1189 = vadd.f32 %v1067, %v1188
      %v1190 = vpop.f32.mrb[0].mxu0
      %v1191 = vadd.f32 %v1071, %v1190
      %v1192 = vpop.f32.mrb[0].mxu0
      %v1193 = vadd.f32 %v1067, %v1192
      %v1194 = vpop.f32.mrb[0].mxu0
      %v1195 = vadd.f32 %v1071, %v1194
      %1196 = vmatprep.mubr.bf16.mxu0 0
      %1197 = vmatmul.mubr.bf16.gmra.mrb[0].mxu0 %v1031
      %v1198 = vpop.f32.mrb[0].mxu0
      %v1199 = vadd.f32 %v1067, %v1198
      %v1200 = vpop.f32.mrb[0].mxu0
      %v1201 = vadd.f32 %v1071, %v1200
      %v1202 = vpop.f32.mrb[0].mxu0
      %v1203 = vadd.f32 %v1067, %v1202
      %v1204 = vpop.f32.mrb[0].mxu0
      %v1205 = vadd.f32 %v1071, %v1204
      %1206 = vmatprep.mubr.bf16.mxu0 0
      %1207 = vmatmul.mubr.bf16.gmra.mrb[0].mxu0 %v1032
      %v1208 = vpop.f32.mrb[0].mxu0
      %v1209 = vadd.f32 %v1067, %v1208
      %v1210 = vpop.f32.mrb[0].mxu0
      %v1211 = vadd.f32 %v1071, %v1210
      %v1212 = vpop.f32.mrb[0].mxu0
      %v1213 = vadd.f32 %v1067, %v1212
      %v1214 = vpop.f32.mrb[0].mxu0
      %v1215 = vadd.f32 %v1071, %v1214
      %1216 = vmatprep.mubr.bf16.mxu0 0
      %1217 = vmatmul.mubr.bf16.gmra.mrb[0].mxu0 %v1033
      %v1218 = vpop.f32.mrb[0].mxu0
      %v1219 = vadd.f32 %v1067, %v1218
      %v1220 = vpop.f32.mrb[0].mxu0
      %v1221 = vadd.f32 %v1071, %v1220
      %v1222 = vpop.f32.mrb[0].mxu0
      %v1223 = vadd.f32 %v1067, %v1222
      %v1224 = vpop.f32.mrb[0].mxu0
      %v1225 = vadd.f32 %v1071, %v1224
      %1226 = vmatprep.mubr.bf16.mxu0 0
      %1227 = vmatmul.mubr.bf16.gmra.mrb[0].mxu0 %v1034
      %v1228 = vpop.f32.mrb[0].mxu0
      %v1229 = vadd.f32 %v1067, %v1228
      %v1230 = vpop.f32.mrb[0].mxu0
      %v1231 = vadd.f32 %v1071, %v1230
      %v1232 = vpop.f32.mrb[0].mxu0
      %v1233 = vadd.f32 %v1067, %v1232
      %v1234 = vpop.f32.mrb[0].mxu0
      %v1235 = vadd.f32 %v1071, %v1234
      %1236 = vmatprep.mubr.bf16.mxu0 0
      %1237 = vmatmul.mubr.bf16.gmra.mrb[0].mxu0 %v1035
      %v1238 = vpop.f32.mrb[0].mxu0
      %v1239 = vadd.f32 %v1067, %v1238
      %v1240 = vpop.f32.mrb[0].mxu0
      %v1241 = vadd.f32 %v1071, %v1240
      %v1242 = vpop.f32.mrb[0].mxu0
      %v1243 = vadd.f32 %v1067, %v1242
      %v1244 = vpop.f32.mrb[0].mxu0
      %v1245 = vadd.f32 %v1071, %v1244
      %1246 = vmatprep.mubr.bf16.mxu0 0
      %1247 = vmatmul.mubr.bf16.gmra.mrb[0].mxu0 %v1036
      %v1248 = vpop.f32.mrb[0].mxu0
      %v1249 = vadd.f32 %v1067, %v1248
      %v1250 = vpop.f32.mrb[0].mxu0
      %v1251 = vadd.f32 %v1071, %v1250
      %v1252 = vpop.f32.mrb[0].mxu0
      %v1253 = vadd.f32 %v1067, %v1252
      %v1254 = vpop.f32.mrb[0].mxu0
      %v1255 = vadd.f32 %v1071, %v1254
      %1256 = vmatprep.mubr.bf16.mxu0 0
      %1257 = vmatmul.mubr.bf16.gmra.mrb[0].mxu0 %v1037
      %v1258 = vpop.f32.mrb[0].mxu0
      %v1259 = vadd.f32 %v1067, %v1258
      %v1260 = vpop.f32.mrb[0].mxu0
      %v1261 = vadd.f32 %v1071, %v1260
      %v1262 = vpop.f32.mrb[0].mxu0
      %v1263 = vadd.f32 %v1067, %v1262
      %v1264 = vpop.f32.mrb[0].mxu0
      %v1265 = vadd.f32 %v1071, %v1264
      %1266 = vmatprep.mubr.bf16.mxu0 0
      %1267 = vmatmul.mubr.bf16.gmra.mrb[0].mxu0 %v1038
      %v1268 = vpop.f32.mrb[0].mxu0
      %v1269 = vadd.f32 %v1067, %v1268
      %v1270 = vpop.f32.mrb[0].mxu0
      %v1271 = vadd.f32 %v1071, %v1270
      %v1272 = vpop.f32.mrb[0].mxu0
      %v1273 = vadd.f32 %v1067, %v1272
      %v1274 = vpop.f32.mrb[0].mxu0
      %v1275 = vadd.f32 %v1071, %v1274
      %1276 = vmatprep.mubr.bf16.mxu0 0
      %1277 = vmatmul.mubr.bf16.gmra.mrb[0].mxu0 %v1039
      %v1278 = vpop.f32.mrb[0].mxu0
      %v1279 = vadd.f32 %v1067, %v1278
      %v1280 = vpop.f32.mrb[0].mxu0
      %v1281 = vadd.f32 %v1071, %v1280
      %v1282 = vpop.f32.mrb[0].mxu0
      %v1283 = vadd.f32 %v1067, %v1282
      %v1284 = vpop.f32.mrb[0].mxu0
      %v1285 = vadd.f32 %v1071, %v1284
      %1286 = vmatprep.mubr.bf16.mxu0 0
      %1287 = vmatmul.mubr.bf16.gmra.mrb[0].mxu0 %v1040
      %v1288 = vpop.f32.mrb[0].mxu0
      %v1289 = vadd.f32 %v1067, %v1288
      %v1290 = vpop.f32.mrb[0].mxu0
      %v1291 = vadd.f32 %v1071, %v1290
      %v1292 = vpop.f32.mrb[0].mxu0
      %v1293 = vadd.f32 %v1067, %v1292
      %v1294 = vpop.f32.mrb[0].mxu0
      %v1295 = vadd.f32 %v1071, %v1294
      %1296 = vmatprep.mubr.bf16.mxu0 0
      %1297 = vmatmul.mubr.bf16.gmra.mrb[0].mxu0 %v1041
      %v1298 = vpop.f32.mrb[0].mxu0
      %v1299 = vadd.f32 %v1067, %v1298
      %v1300 = vpop.f32.mrb[0].mxu0
      %v1301 = vadd.f32 %v1071, %v1300
      %v1302 = vpop.f32.mrb[0].mxu0
      %v1303 = vadd.f32 %v1067, %v1302
      %v1304 = vpop.f32.mrb[0].mxu0
      %v1305 = vadd.f32 %v1071, %v1304
      %1306 = vmatprep.mubr.bf16.mxu0 0
      %1307 = vmatmul.mubr.bf16.gmra.mrb[0].mxu0 %v1042
      %v1308 = vpop.f32.mrb[0].mxu0
      %v1309 = vadd.f32 %v1067, %v1308
      %v1310 = vpop.f32.mrb[0].mxu0
      %v1311 = vadd.f32 %v1071, %v1310
      %v1312 = vpop.f32.mrb[0].mxu0
      %v1313 = vadd.f32 %v1067, %v1312
      %v1314 = vpop.f32.mrb[0].mxu0
      %v1315 = vadd.f32 %v1071, %v1314
      %1316 = vmatprep.mubr.bf16.mxu0 0
      %1317 = vmatmul.mubr.bf16.gmra.mrb[0].mxu0 %v1043
      %v1318 = vpop.f32.mrb[0].mxu0
      %v1319 = vadd.f32 %v1067, %v1318
      %v1320 = vpop.f32.mrb[0].mxu0
      %v1321 = vadd.f32 %v1071, %v1320
      %v1322 = vpop.f32.mrb[0].mxu0
      %v1323 = vadd.f32 %v1067, %v1322
      %v1324 = vpop.f32.mrb[0].mxu0
      %v1325 = vadd.f32 %v1071, %v1324
      %1326 = vmatprep.mubr.bf16.mxu0 0
      %1327 = vmatmul.mubr.bf16.gmra.mrb[0].mxu0 %v1044
      %v1328 = vpop.f32.mrb[0].mxu0
      %v1329 = vadd.f32 %v1067, %v1328
      %v1330 = vpop.f32.mrb[0].mxu0
      %v1331 = vadd.f32 %v1071, %v1330
      %v1332 = vpop.f32.mrb[0].mxu0
      %v1333 = vadd.f32 %v1067, %v1332
      %v1334 = vpop.f32.mrb[0].mxu0
      %v1335 = vadd.f32 %v1071, %v1334
      %1336 = vmatprep.mubr.bf16.mxu0 0
      %1337 = vmatmul.mubr.bf16.gmra.mrb[0].mxu0 %v1045
      %v1338 = vpop.f32.mrb[0].mxu0
      %v1339 = vadd.f32 %v1067, %v1338
      %v1340 = vpop.f32.mrb[0].mxu0
      %v1341 = vadd.f32 %v1071, %v1340
      %v1342 = vpop.f32.mrb[0].mxu0
      %v1343 = vadd.f32 %v1067, %v1342
      %v1344 = vpop.f32.mrb[0].mxu0
      %v1345 = vadd.f32 %v1071, %v1344
      %1346 = vdwg.mxu0
      %1347 = vst [vmem:[%s427] sm:$0xff] %v1189
      %1348 = vst [vmem:[%s427 + $0x8] sm:$0xff] %v1191
      %1349 = vst [vmem:[%s427 + $0x10] sm:$0xff] %v1193
      %1350 = vst [vmem:[%s427 + $0x18] sm:$0xff] %v1195
      %1351 = vst [vmem:[%s427 + $0x20] sm:$0xff] %v1199
      %1352 = vst [vmem:[%s427 + $0x28] sm:$0xff] %v1201
      %1353 = vst [vmem:[%s427 + $0x30] sm:$0xff] %v1203
      %1354 = vst [vmem:[%s427 + $0x38] sm:$0xff] %v1205
      %1355 = vst [vmem:[%s427 + $0x40] sm:$0xff] %v1209
      %1356 = vst [vmem:[%s427 + $0x48] sm:$0xff] %v1211
      %1357 = vst [vmem:[%s427 + $0x50] sm:$0xff] %v1213
      %1358 = vst [vmem:[%s427 + $0x58] sm:$0xff] %v1215
      %1359 = vst [vmem:[%s427 + $0x60] sm:$0xff] %v1219
      %1360 = vst [vmem:[%s427 + $0x68] sm:$0xff] %v1221
      %1361 = vst [vmem:[%s427 + $0x70] sm:$0xff] %v1223
      %1362 = vst [vmem:[%s427 + $0x78] sm:$0xff] %v1225
      %1363 = vst [vmem:[%s427 + $0x80] sm:$0xff] %v1229
      %1364 = vst [vmem:[%s427 + $0x88] sm:$0xff] %v1231
      %1365 = vst [vmem:[%s427 + $0x90] sm:$0xff] %v1233
      %1366 = vst [vmem:[%s427 + $0x98] sm:$0xff] %v1235
      %1367 = vst [vmem:[%s427 + $0xa0] sm:$0xff] %v1239
      %1368 = vst [vmem:[%s427 + $0xa8] sm:$0xff] %v1241
      %1369 = vst [vmem:[%s427 + $0xb0] sm:$0xff] %v1243
      %1370 = vst [vmem:[%s427 + $0xb8] sm:$0xff] %v1245
      %1371 = vst [vmem:[%s427 + $0xc0] sm:$0xff] %v1249
      %1372 = vst [vmem:[%s427 + $0xc8] sm:$0xff] %v1251
      %1373 = vst [vmem:[%s427 + $0xd0] sm:$0xff] %v1253
      %1374 = vst [vmem:[%s427 + $0xd8] sm:$0xff] %v1255
      %1375 = vst [vmem:[%s427 + $0xe0] sm:$0xff] %v1259
      %1376 = vst [vmem:[%s427 + $0xe8] sm:$0xff] %v1261
      %1377 = vst [vmem:[%s427 + $0xf0] sm:$0xff] %v1263
      %1378 = vst [vmem:[%s427 + $0xf8] sm:$0xff] %v1265
      %1379 = vst [vmem:[%s427 + $0x100] sm:$0xff] %v1269
      %1380 = vst [vmem:[%s427 + $0x108] sm:$0xff] %v1271
      %1381 = vst [vmem:[%s427 + $0x110] sm:$0xff] %v1273
      %1382 = vst [vmem:[%s427 + $0x118] sm:$0xff] %v1275
      %1383 = vst [vmem:[%s427 + $0x120] sm:$0xff] %v1279
      %1384 = vst [vmem:[%s427 + $0x128] sm:$0xff] %v1281
      %1385 = vst [vmem:[%s427 + $0x130] sm:$0xff] %v1283
      %1386 = vst [vmem:[%s427 + $0x138] sm:$0xff] %v1285
      %1387 = vst [vmem:[%s427 + $0x140] sm:$0xff] %v1289
      %1388 = vst [vmem:[%s427 + $0x148] sm:$0xff] %v1291
      %1389 = vst [vmem:[%s427 + $0x150] sm:$0xff] %v1293
      %1390 = vst [vmem:[%s427 + $0x158] sm:$0xff] %v1295
      %1391 = vst [vmem:[%s427 + $0x160] sm:$0xff] %v1299
      %1392 = vst [vmem:[%s427 + $0x168] sm:$0xff] %v1301
      %1393 = vst [vmem:[%s427 + $0x170] sm:$0xff] %v1303
      %1394 = vst [vmem:[%s427 + $0x178] sm:$0xff] %v1305
      %1395 = vst [vmem:[%s427 + $0x180] sm:$0xff] %v1309
      %1396 = vst [vmem:[%s427 + $0x188] sm:$0xff] %v1311
      %1397 = vst [vmem:[%s427 + $0x190] sm:$0xff] %v1313
      %1398 = vst [vmem:[%s427 + $0x198] sm:$0xff] %v1315
      %1399 = vst [vmem:[%s427 + $0x1a0] sm:$0xff] %v1319
      %1400 = vst [vmem:[%s427 + $0x1a8] sm:$0xff] %v1321
      %1401 = vst [vmem:[%s427 + $0x1b0] sm:$0xff] %v1323
      %1402 = vst [vmem:[%s427 + $0x1b8] sm:$0xff] %v1325
      %1403 = vst [vmem:[%s427 + $0x1c0] sm:$0xff] %v1329
      %1404 = vst [vmem:[%s427 + $0x1c8] sm:$0xff] %v1331
      %1405 = vst [vmem:[%s427 + $0x1d0] sm:$0xff] %v1333
      %1406 = vst [vmem:[%s427 + $0x1d8] sm:$0xff] %v1335
      %1407 = vst [vmem:[%s427 + $0x1e0] sm:$0xff] %v1339
      %1408 = vst [vmem:[%s427 + $0x1e8] sm:$0xff] %v1341
      %1409 = vst [vmem:[%s427 + $0x1f0] sm:$0xff] %v1343
      %1410 = vst [vmem:[%s427 + $0x1f8] sm:$0xff] %v1345
      %v1411 = vld [vmem:[%s9] sm:$0xf]
      %v1412 = vld [vmem:[%s9 + $0x4] sm:$0xf]
      %v1413 = vld [vmem:[%s9 + $0x8] sm:$0xf]
      %v1414 = vld [vmem:[%s9 + $0xc] sm:$0xf]
      %v1415 = vld [vmem:[%s9 + $0x10] sm:$0xf]
      %v1416 = vld [vmem:[%s9 + $0x14] sm:$0xf]
      %v1417 = vld [vmem:[%s9 + $0x18] sm:$0xf]
      %v1418 = vld [vmem:[%s9 + $0x1c] sm:$0xf]
      %v1419 = vld [vmem:[%s9 + $0x20] sm:$0xf]
      %v1420 = vld [vmem:[%s9 + $0x24] sm:$0xf]
      %v1421 = vld [vmem:[%s9 + $0x28] sm:$0xf]
      %v1422 = vld [vmem:[%s9 + $0x2c] sm:$0xf]
      %v1423 = vld [vmem:[%s9 + $0x30] sm:$0xf]
      %v1424 = vld [vmem:[%s9 + $0x34] sm:$0xf]
      %v1425 = vld [vmem:[%s9 + $0x38] sm:$0xf]
      %v1426 = vld [vmem:[%s9 + $0x3c] sm:$0xf]
      %v1427 = vld [vmem:[%s9 + $0x40] sm:$0xf]
      %v1428 = vld [vmem:[%s9 + $0x44] sm:$0xf]
      %v1429 = vld [vmem:[%s9 + $0x48] sm:$0xf]
      %v1430 = vld [vmem:[%s9 + $0x4c] sm:$0xf]
      %v1431 = vld [vmem:[%s9 + $0x50] sm:$0xf]
      %v1432 = vld [vmem:[%s9 + $0x54] sm:$0xf]
      %v1433 = vld [vmem:[%s9 + $0x58] sm:$0xf]
      %v1434 = vld [vmem:[%s9 + $0x5c] sm:$0xf]
      %v1435 = vld [vmem:[%s9 + $0x60] sm:$0xf]
      %v1436 = vld [vmem:[%s9 + $0x64] sm:$0xf]
      %v1437 = vld [vmem:[%s9 + $0x68] sm:$0xf]
      %v1438 = vld [vmem:[%s9 + $0x6c] sm:$0xf]
      %v1439 = vld [vmem:[%s9 + $0x70] sm:$0xf]
      %v1440 = vld [vmem:[%s9 + $0x74] sm:$0xf]
      %v1441 = vld [vmem:[%s9 + $0x78] sm:$0xf]
      %v1442 = vld [vmem:[%s9 + $0x7c] sm:$0xf]
      %v1475 = vunpack.c.l.b16 %v469
      %v1476 = vunpack.c.h.b16 %v469
      %v1477 = vunpack.c.l.b16 %v470
      %v1478 = vunpack.c.h.b16 %v470
      %v1479 = vunpack.c.l.b16 %v471
      %v1480 = vunpack.c.h.b16 %v471
      %v1481 = vunpack.c.l.b16 %v472
      %v1482 = vunpack.c.h.b16 %v472
      %v1483 = vunpack.c.l.b16 %v473
      %v1484 = vunpack.c.h.b16 %v473
      %v1485 = vunpack.c.l.b16 %v474
      %v1486 = vunpack.c.h.b16 %v474
      %v1487 = vunpack.c.l.b16 %v475
      %v1488 = vunpack.c.h.b16 %v475
      %v1489 = vunpack.c.l.b16 %v476
      %v1490 = vunpack.c.h.b16 %v476
      %v1491 = vunpack.c.l.b16 %v477
      %v1492 = vunpack.c.h.b16 %v477
      %v1493 = vunpack.c.l.b16 %v478
      %v1494 = vunpack.c.h.b16 %v478
      %v1495 = vunpack.c.l.b16 %v479
      %v1496 = vunpack.c.h.b16 %v479
      %v1497 = vunpack.c.l.b16 %v480
      %v1498 = vunpack.c.h.b16 %v480
      %v1499 = vunpack.c.l.b16 %v481
      %v1500 = vunpack.c.h.b16 %v481
      %v1501 = vunpack.c.l.b16 %v482
      %v1502 = vunpack.c.h.b16 %v482
      %v1503 = vunpack.c.l.b16 %v483
      %v1504 = vunpack.c.h.b16 %v483
      %v1505 = vunpack.c.l.b16 %v484
      %v1506 = vunpack.c.h.b16 %v484
      %v1507 = vunpack.c.l.b16 %v485
      %v1508 = vunpack.c.h.b16 %v485
      %v1509 = vunpack.c.l.b16 %v486
      %v1510 = vunpack.c.h.b16 %v486
      %v1511 = vunpack.c.l.b16 %v487
      %v1512 = vunpack.c.h.b16 %v487
      %v1513 = vunpack.c.l.b16 %v488
      %v1514 = vunpack.c.h.b16 %v488
      %v1515 = vunpack.c.l.b16 %v489
      %v1516 = vunpack.c.h.b16 %v489
      %v1517 = vunpack.c.l.b16 %v490
      %v1518 = vunpack.c.h.b16 %v490
      %v1519 = vunpack.c.l.b16 %v491
      %v1520 = vunpack.c.h.b16 %v491
      %v1521 = vunpack.c.l.b16 %v492
      %v1522 = vunpack.c.h.b16 %v492
      %v1523 = vunpack.c.l.b16 %v493
      %v1524 = vunpack.c.h.b16 %v493
      %v1525 = vunpack.c.l.b16 %v494
      %v1526 = vunpack.c.h.b16 %v494
      %v1527 = vunpack.c.l.b16 %v495
      %v1528 = vunpack.c.h.b16 %v495
      %v1529 = vunpack.c.l.b16 %v496
      %v1530 = vunpack.c.h.b16 %v496
      %v1531 = vunpack.c.l.b16 %v497
      %v1532 = vunpack.c.h.b16 %v497
      %v1533 = vunpack.c.l.b16 %v498
      %v1534 = vunpack.c.h.b16 %v498
      %v1535 = vunpack.c.l.b16 %v499
      %v1536 = vunpack.c.h.b16 %v499
      %v1537 = vunpack.c.l.b16 %v500
      %v1538 = vunpack.c.h.b16 %v500
      %v1539 = vpack.c.b16 %v1477, %v1475
      %v1540 = vpack.c.b16 %v1478, %v1476
      %v1541 = vpack.c.b16 %v1481, %v1479
      %v1542 = vpack.c.b16 %v1482, %v1480
      %v1543 = vpack.c.b16 %v1485, %v1483
      %v1544 = vpack.c.b16 %v1486, %v1484
      %v1545 = vpack.c.b16 %v1489, %v1487
      %v1546 = vpack.c.b16 %v1490, %v1488
      %v1547 = vpack.c.b16 %v1493, %v1491
      %v1548 = vpack.c.b16 %v1494, %v1492
      %v1549 = vpack.c.b16 %v1497, %v1495
      %v1550 = vpack.c.b16 %v1498, %v1496
      %v1551 = vpack.c.b16 %v1501, %v1499
      %v1552 = vpack.c.b16 %v1502, %v1500
      %v1553 = vpack.c.b16 %v1505, %v1503
      %v1554 = vpack.c.b16 %v1506, %v1504
      %v1555 = vpack.c.b16 %v1509, %v1507
      %v1556 = vpack.c.b16 %v1510, %v1508
      %v1557 = vpack.c.b16 %v1513, %v1511
      %v1558 = vpack.c.b16 %v1514, %v1512
      %v1559 = vpack.c.b16 %v1517, %v1515
      %v1560 = vpack.c.b16 %v1518, %v1516
      %v1561 = vpack.c.b16 %v1521, %v1519
      %v1562 = vpack.c.b16 %v1522, %v1520
      %v1563 = vpack.c.b16 %v1525, %v1523
      %v1564 = vpack.c.b16 %v1526, %v1524
      %v1565 = vpack.c.b16 %v1529, %v1527
      %v1566 = vpack.c.b16 %v1530, %v1528
      %v1567 = vpack.c.b16 %v1533, %v1531
      %v1568 = vpack.c.b16 %v1534, %v1532
      %v1569 = vpack.c.b16 %v1537, %v1535
      %v1570 = vpack.c.b16 %v1538, %v1536
      %v1635 = vunpack.c.l.b16 %v1411
      %v1636 = vunpack.c.l.b16 %v1412
      %v1637 = vunpack.c.l.b16 %v1413
      %v1638 = vunpack.c.l.b16 %v1414
      %v1639 = vunpack.c.l.b16 %v1415
      %v1640 = vunpack.c.l.b16 %v1416
      %v1641 = vunpack.c.l.b16 %v1417
      %v1642 = vunpack.c.l.b16 %v1418
      %v1643 = vunpack.c.l.b16 %v1419
      %v1644 = vunpack.c.l.b16 %v1420
      %v1645 = vunpack.c.l.b16 %v1421
      %v1646 = vunpack.c.l.b16 %v1422
      %v1647 = vunpack.c.l.b16 %v1423
      %v1648 = vunpack.c.l.b16 %v1424
      %v1649 = vunpack.c.l.b16 %v1425
      %v1650 = vunpack.c.l.b16 %v1426
      %v1651 = vunpack.c.l.b16 %v1427
      %v1652 = vunpack.c.l.b16 %v1428
      %v1653 = vunpack.c.l.b16 %v1429
      %v1654 = vunpack.c.l.b16 %v1430
      %v1655 = vunpack.c.l.b16 %v1431
      %v1656 = vunpack.c.l.b16 %v1432
      %v1657 = vunpack.c.l.b16 %v1433
      %v1658 = vunpack.c.l.b16 %v1434
      %v1659 = vunpack.c.l.b16 %v1435
      %v1660 = vunpack.c.l.b16 %v1436
      %v1661 = vunpack.c.l.b16 %v1437
      %v1662 = vunpack.c.l.b16 %v1438
      %v1663 = vunpack.c.l.b16 %v1439
      %v1664 = vunpack.c.l.b16 %v1440
      %v1665 = vunpack.c.l.b16 %v1441
      %v1666 = vunpack.c.l.b16 %v1442
      %v1667 = vpack.c.b16 %v1636, %v1635
      %v1668 = vpack.c.b16 %v1638, %v1637
      %v1669 = vpack.c.b16 %v1640, %v1639
      %v1670 = vpack.c.b16 %v1642, %v1641
      %v1671 = vpack.c.b16 %v1644, %v1643
      %v1672 = vpack.c.b16 %v1646, %v1645
      %v1673 = vpack.c.b16 %v1648, %v1647
      %v1674 = vpack.c.b16 %v1650, %v1649
      %v1675 = vpack.c.b16 %v1652, %v1651
      %v1676 = vpack.c.b16 %v1654, %v1653
      %v1677 = vpack.c.b16 %v1656, %v1655
      %v1678 = vpack.c.b16 %v1658, %v1657
      %v1679 = vpack.c.b16 %v1660, %v1659
      %v1680 = vpack.c.b16 %v1662, %v1661
      %v1681 = vpack.c.b16 %v1664, %v1663
      %v1682 = vpack.c.b16 %v1666, %v1665
      %1699 = vmatprep.subr.bf16.mxu0 0
      %1700 = vmatpush1.bf16.msra.mxu0 %v1667
      %1701 = vmatprep.subr.bf16.mxu0 0
      %1702 = vmatpush1.bf16.msra.mxu0 %v1668
      %1703 = vmatprep.subr.bf16.mxu0 0
      %1704 = vmatpush1.bf16.msra.mxu0 %v1669
      %1705 = vmatprep.subr.bf16.mxu0 0
      %1706 = vmatpush1.bf16.msra.mxu0 %v1670
      %1707 = vmatprep.subr.bf16.mxu0 0
      %1708 = vmatpush1.bf16.msra.mxu0 %v1671
      %1709 = vmatprep.subr.bf16.mxu0 0
      %1710 = vmatpush1.bf16.msra.mxu0 %v1672
      %1711 = vmatprep.subr.bf16.mxu0 0
      %1712 = vmatpush1.bf16.msra.mxu0 %v1673
      %1713 = vmatprep.subr.bf16.mxu0 0
      %1714 = vmatpush1.bf16.msra.mxu0 %v1674
      %1715 = vmatprep.subr.bf16.mxu0 0
      %1716 = vmatpush1.bf16.msra.mxu0 %v1675
      %1717 = vmatprep.subr.bf16.mxu0 0
      %1718 = vmatpush1.bf16.msra.mxu0 %v1676
      %1719 = vmatprep.subr.bf16.mxu0 0
      %1720 = vmatpush1.bf16.msra.mxu0 %v1677
      %1721 = vmatprep.subr.bf16.mxu0 0
      %1722 = vmatpush1.bf16.msra.mxu0 %v1678
      %1723 = vmatprep.subr.bf16.mxu0 0
      %1724 = vmatpush1.bf16.msra.mxu0 %v1679
      %1725 = vmatprep.subr.bf16.mxu0 0
      %1726 = vmatpush1.bf16.msra.mxu0 %v1680
      %1727 = vmatprep.subr.bf16.mxu0 0
      %1728 = vmatpush1.bf16.msra.mxu0 %v1681
      %1729 = vmatprep.subr.bf16.mxu0 0
      %1730 = vmatpush1.bf16.msra.mxu0 %v1682
      %1731 = vmatprep.mubr.bf16.mxu0 %v1540
      %1732 = vmatmul.mubr.bf16.gmra.mrb[0].mxu0 %v1539
      %v1733 = vpop.f32.mrb[0].mxu0
      %v1734 = vadd.f32 0.0, %v1733
      %v1735 = vpop.f32.mrb[0].mxu0
      %v1736 = vpop.f32.mrb[0].mxu0
      %v1737 = vadd.f32 0.0, %v1736
      %v1738 = vpop.f32.mrb[0].mxu0
      %1739 = vmatprep.mubr.bf16.mxu0 %v1542
      %1740 = vmatmul.mubr.bf16.gmra.mrb[0].mxu0 %v1541
      %v1741 = vpop.f32.mrb[0].mxu0
      %v1742 = vadd.f32 0.0, %v1741
      %v1743 = vpop.f32.mrb[0].mxu0
      %v1744 = vpop.f32.mrb[0].mxu0
      %v1745 = vadd.f32 0.0, %v1744
      %v1746 = vpop.f32.mrb[0].mxu0
      %1747 = vmatprep.mubr.bf16.mxu0 %v1544
      %1748 = vmatmul.mubr.bf16.gmra.mrb[0].mxu0 %v1543
      %v1749 = vpop.f32.mrb[0].mxu0
      %v1750 = vadd.f32 0.0, %v1749
      %v1751 = vpop.f32.mrb[0].mxu0
      %v1752 = vpop.f32.mrb[0].mxu0
      %v1753 = vadd.f32 0.0, %v1752
      %v1754 = vpop.f32.mrb[0].mxu0
      %1755 = vmatprep.mubr.bf16.mxu0 %v1546
      %1756 = vmatmul.mubr.bf16.gmra.mrb[0].mxu0 %v1545
      %v1757 = vpop.f32.mrb[0].mxu0
      %v1758 = vadd.f32 0.0, %v1757
      %v1759 = vpop.f32.mrb[0].mxu0
      %v1760 = vpop.f32.mrb[0].mxu0
      %v1761 = vadd.f32 0.0, %v1760
      %v1762 = vpop.f32.mrb[0].mxu0
      %1763 = vmatprep.mubr.bf16.mxu0 %v1548
      %1764 = vmatmul.mubr.bf16.gmra.mrb[0].mxu0 %v1547
      %v1765 = vpop.f32.mrb[0].mxu0
      %v1766 = vadd.f32 0.0, %v1765
      %v1767 = vpop.f32.mrb[0].mxu0
      %v1768 = vpop.f32.mrb[0].mxu0
      %v1769 = vadd.f32 0.0, %v1768
      %v1770 = vpop.f32.mrb[0].mxu0
      %1771 = vmatprep.mubr.bf16.mxu0 %v1550
      %1772 = vmatmul.mubr.bf16.gmra.mrb[0].mxu0 %v1549
      %v1773 = vpop.f32.mrb[0].mxu0
      %v1774 = vadd.f32 0.0, %v1773
      %v1775 = vpop.f32.mrb[0].mxu0
      %v1776 = vpop.f32.mrb[0].mxu0
      %v1777 = vadd.f32 0.0, %v1776
      %v1778 = vpop.f32.mrb[0].mxu0
      %1779 = vmatprep.mubr.bf16.mxu0 %v1552
      %1780 = vmatmul.mubr.bf16.gmra.mrb[0].mxu0 %v1551
      %v1781 = vpop.f32.mrb[0].mxu0
      %v1782 = vadd.f32 0.0, %v1781
      %v1783 = vpop.f32.mrb[0].mxu0
      %v1784 = vpop.f32.mrb[0].mxu0
      %v1785 = vadd.f32 0.0, %v1784
      %v1786 = vpop.f32.mrb[0].mxu0
      %1787 = vmatprep.mubr.bf16.mxu0 %v1554
      %1788 = vmatmul.mubr.bf16.gmra.mrb[0].mxu0 %v1553
      %v1789 = vpop.f32.mrb[0].mxu0
      %v1790 = vadd.f32 0.0, %v1789
      %v1791 = vpop.f32.mrb[0].mxu0
      %v1792 = vpop.f32.mrb[0].mxu0
      %v1793 = vadd.f32 0.0, %v1792
      %v1794 = vpop.f32.mrb[0].mxu0
      %1795 = vmatprep.mubr.bf16.mxu0 %v1556
      %1796 = vmatmul.mubr.bf16.gmra.mrb[0].mxu0 %v1555
      %v1797 = vpop.f32.mrb[0].mxu0
      %v1798 = vadd.f32 0.0, %v1797
      %v1799 = vpop.f32.mrb[0].mxu0
      %v1800 = vpop.f32.mrb[0].mxu0
      %v1801 = vadd.f32 0.0, %v1800
      %v1802 = vpop.f32.mrb[0].mxu0
      %1803 = vmatprep.mubr.bf16.mxu0 %v1558
      %1804 = vmatmul.mubr.bf16.gmra.mrb[0].mxu0 %v1557
      %v1805 = vpop.f32.mrb[0].mxu0
      %v1806 = vadd.f32 0.0, %v1805
      %v1807 = vpop.f32.mrb[0].mxu0
      %v1808 = vpop.f32.mrb[0].mxu0
      %v1809 = vadd.f32 0.0, %v1808
      %v1810 = vpop.f32.mrb[0].mxu0
      %1811 = vmatprep.mubr.bf16.mxu0 %v1560
      %1812 = vmatmul.mubr.bf16.gmra.mrb[0].mxu0 %v1559
      %v1813 = vpop.f32.mrb[0].mxu0
      %v1814 = vadd.f32 0.0, %v1813
      %v1815 = vpop.f32.mrb[0].mxu0
      %v1816 = vpop.f32.mrb[0].mxu0
      %v1817 = vadd.f32 0.0, %v1816
      %v1818 = vpop.f32.mrb[0].mxu0
      %1819 = vmatprep.mubr.bf16.mxu0 %v1562
      %1820 = vmatmul.mubr.bf16.gmra.mrb[0].mxu0 %v1561
      %v1821 = vpop.f32.mrb[0].mxu0
      %v1822 = vadd.f32 0.0, %v1821
      %v1823 = vpop.f32.mrb[0].mxu0
      %v1824 = vpop.f32.mrb[0].mxu0
      %v1825 = vadd.f32 0.0, %v1824
      %v1826 = vpop.f32.mrb[0].mxu0
      %1827 = vmatprep.mubr.bf16.mxu0 %v1564
      %1828 = vmatmul.mubr.bf16.gmra.mrb[0].mxu0 %v1563
      %v1829 = vpop.f32.mrb[0].mxu0
      %v1830 = vadd.f32 0.0, %v1829
      %v1831 = vpop.f32.mrb[0].mxu0
      %v1832 = vpop.f32.mrb[0].mxu0
      %v1833 = vadd.f32 0.0, %v1832
      %v1834 = vpop.f32.mrb[0].mxu0
      %1835 = vmatprep.mubr.bf16.mxu0 %v1566
      %1836 = vmatmul.mubr.bf16.gmra.mrb[0].mxu0 %v1565
      %v1837 = vpop.f32.mrb[0].mxu0
      %v1838 = vadd.f32 0.0, %v1837
      %v1839 = vpop.f32.mrb[0].mxu0
      %v1840 = vpop.f32.mrb[0].mxu0
      %v1841 = vadd.f32 0.0, %v1840
      %v1842 = vpop.f32.mrb[0].mxu0
      %1843 = vmatprep.mubr.bf16.mxu0 %v1568
      %1844 = vmatmul.mubr.bf16.gmra.mrb[0].mxu0 %v1567
      %v1845 = vpop.f32.mrb[0].mxu0
      %v1846 = vadd.f32 0.0, %v1845
      %v1847 = vpop.f32.mrb[0].mxu0
      %v1848 = vpop.f32.mrb[0].mxu0
      %v1849 = vadd.f32 0.0, %v1848
      %v1850 = vpop.f32.mrb[0].mxu0
      %1851 = vmatprep.mubr.bf16.mxu0 %v1570
      %1852 = vmatmul.mubr.bf16.gmra.mrb[0].mxu0 %v1569
      %v1853 = vpop.f32.mrb[0].mxu0
      %v1854 = vadd.f32 0.0, %v1853
      %v1855 = vpop.f32.mrb[0].mxu0
      %v1856 = vpop.f32.mrb[0].mxu0
      %v1857 = vadd.f32 0.0, %v1856
      %v1858 = vpop.f32.mrb[0].mxu0
      %1859 = vdwg.mxu0
      %v1860 = vmul.f32 %v998, %v998
      %v1861 = vmul.f32 %v999, %v999
      %v1862 = vmul.f32 %v1000, %v1000
      %v1863 = vmul.f32 %v1001, %v1001
      %v1864 = vmul.f32 %v1002, %v1002
      %v1865 = vmul.f32 %v1003, %v1003
      %v1866 = vmul.f32 %v1004, %v1004
      %v1867 = vmul.f32 %v1005, %v1005
      %v1868 = vmul.f32 %v1006, %v1006
      %v1869 = vmul.f32 %v1007, %v1007
      %v1870 = vmul.f32 %v1008, %v1008
      %v1871 = vmul.f32 %v1009, %v1009
      %v1872 = vmul.f32 %v1010, %v1010
      %v1873 = vmul.f32 %v1011, %v1011
      %v1874 = vmul.f32 %v1012, %v1012
      %v1875 = vmul.f32 %v1013, %v1013
      %v1876 = vmul.f32 %v1014, %v1014
      %v1877 = vmul.f32 %v1015, %v1015
      %v1878 = vmul.f32 %v1016, %v1016
      %v1879 = vmul.f32 %v1017, %v1017
      %v1880 = vmul.f32 %v1018, %v1018
      %v1881 = vmul.f32 %v1019, %v1019
      %v1882 = vmul.f32 %v1020, %v1020
      %v1883 = vmul.f32 %v1021, %v1021
      %v1884 = vmul.f32 %v1022, %v1022
      %v1885 = vmul.f32 %v1023, %v1023
      %v1886 = vmul.f32 %v1024, %v1024
      %v1887 = vmul.f32 %v1025, %v1025
      %v1888 = vmul.f32 %v1026, %v1026
      %v1889 = vmul.f32 %v1027, %v1027
      %v1890 = vmul.f32 %v1028, %v1028
      %v1891 = vmul.f32 %v1029, %v1029
      %v1892 = vsub.f32 1.0, %v1860
      %v1893 = vsub.f32 1.0, %v1861
      %v1894 = vsub.f32 1.0, %v1862
      %v1895 = vsub.f32 1.0, %v1863
      %v1896 = vsub.f32 1.0, %v1864
      %v1897 = vsub.f32 1.0, %v1865
      %v1898 = vsub.f32 1.0, %v1866
      %v1899 = vsub.f32 1.0, %v1867
      %v1900 = vsub.f32 1.0, %v1868
      %v1901 = vsub.f32 1.0, %v1869
      %v1902 = vsub.f32 1.0, %v1870
      %v1903 = vsub.f32 1.0, %v1871
      %v1904 = vsub.f32 1.0, %v1872
      %v1905 = vsub.f32 1.0, %v1873
      %v1906 = vsub.f32 1.0, %v1874
      %v1907 = vsub.f32 1.0, %v1875
      %v1908 = vsub.f32 1.0, %v1876
      %v1909 = vsub.f32 1.0, %v1877
      %v1910 = vsub.f32 1.0, %v1878
      %v1911 = vsub.f32 1.0, %v1879
      %v1912 = vsub.f32 1.0, %v1880
      %v1913 = vsub.f32 1.0, %v1881
      %v1914 = vsub.f32 1.0, %v1882
      %v1915 = vsub.f32 1.0, %v1883
      %v1916 = vsub.f32 1.0, %v1884
      %v1917 = vsub.f32 1.0, %v1885
      %v1918 = vsub.f32 1.0, %v1886
      %v1919 = vsub.f32 1.0, %v1887
      %v1920 = vsub.f32 1.0, %v1888
      %v1921 = vsub.f32 1.0, %v1889
      %v1922 = vsub.f32 1.0, %v1890
      %v1923 = vsub.f32 1.0, %v1891
      %v1924 = vmul.f32 %v1734, %v1892
      %v1925 = vmul.f32 %v1737, %v1893
      %v1926 = vmul.f32 %v1742, %v1894
      %v1927 = vmul.f32 %v1745, %v1895
      %v1928 = vmul.f32 %v1750, %v1896
      %v1929 = vmul.f32 %v1753, %v1897
      %v1930 = vmul.f32 %v1758, %v1898
      %v1931 = vmul.f32 %v1761, %v1899
      %v1932 = vmul.f32 %v1766, %v1900
      %v1933 = vmul.f32 %v1769, %v1901
      %v1934 = vmul.f32 %v1774, %v1902
      %v1935 = vmul.f32 %v1777, %v1903
      %v1936 = vmul.f32 %v1782, %v1904
      %v1937 = vmul.f32 %v1785, %v1905
      %v1938 = vmul.f32 %v1790, %v1906
      %v1939 = vmul.f32 %v1793, %v1907
      %v1940 = vmul.f32 %v1798, %v1908
      %v1941 = vmul.f32 %v1801, %v1909
      %v1942 = vmul.f32 %v1806, %v1910
      %v1943 = vmul.f32 %v1809, %v1911
      %v1944 = vmul.f32 %v1814, %v1912
      %v1945 = vmul.f32 %v1817, %v1913
      %v1946 = vmul.f32 %v1822, %v1914
      %v1947 = vmul.f32 %v1825, %v1915
      %v1948 = vmul.f32 %v1830, %v1916
      %v1949 = vmul.f32 %v1833, %v1917
      %v1950 = vmul.f32 %v1838, %v1918
      %v1951 = vmul.f32 %v1841, %v1919
      %v1952 = vmul.f32 %v1846, %v1920
      %v1953 = vmul.f32 %v1849, %v1921
      %v1954 = vmul.f32 %v1854, %v1922
      %v1955 = vmul.f32 %v1857, %v1923
      %v1956 = vpack.c.bf16 %v1925, %v1924
      %v1957 = vpack.c.bf16 %v1927, %v1926
      %v1958 = vpack.c.bf16 %v1929, %v1928
      %v1959 = vpack.c.bf16 %v1931, %v1930
      %v1960 = vpack.c.bf16 %v1933, %v1932
      %v1961 = vpack.c.bf16 %v1935, %v1934
      %v1962 = vpack.c.bf16 %v1937, %v1936
      %v1963 = vpack.c.bf16 %v1939, %v1938
      %v1964 = vpack.c.bf16 %v1941, %v1940
      %v1965 = vpack.c.bf16 %v1943, %v1942
      %v1966 = vpack.c.bf16 %v1945, %v1944
      %v1967 = vpack.c.bf16 %v1947, %v1946
      %v1968 = vpack.c.bf16 %v1949, %v1948
      %v1969 = vpack.c.bf16 %v1951, %v1950
      %v1970 = vpack.c.bf16 %v1953, %v1952
      %v1971 = vpack.c.bf16 %v1955, %v1954
      %v1972 = vld [vmem:[%s8] sm:$0xff]
      %v1973 = vld [vmem:[%s8 + $0x8] sm:$0xff]
      %v1974 = vld [vmem:[%s8 + $0x10] sm:$0xff]
      %v1975 = vld [vmem:[%s8 + $0x18] sm:$0xff]
      %v1976 = vld [vmem:[%s8 + $0x20] sm:$0xff]
      %v1977 = vld [vmem:[%s8 + $0x28] sm:$0xff]
      %v1978 = vld [vmem:[%s8 + $0x30] sm:$0xff]
      %v1979 = vld [vmem:[%s8 + $0x38] sm:$0xff]
      %v1980 = vld [vmem:[%s8 + $0x40] sm:$0xff]
      %v1981 = vld [vmem:[%s8 + $0x48] sm:$0xff]
      %v1982 = vld [vmem:[%s8 + $0x50] sm:$0xff]
      %v1983 = vld [vmem:[%s8 + $0x58] sm:$0xff]
      %v1984 = vld [vmem:[%s8 + $0x60] sm:$0xff]
      %v1985 = vld [vmem:[%s8 + $0x68] sm:$0xff]
      %v1986 = vld [vmem:[%s8 + $0x70] sm:$0xff]
      %v1987 = vld [vmem:[%s8 + $0x78] sm:$0xff]
      %v2004 = vunpack.c.l.b16 %v1972
      %v2005 = vunpack.c.h.b16 %v1972
      %v2006 = vunpack.c.l.b16 %v1973
      %v2007 = vunpack.c.h.b16 %v1973
      %v2008 = vunpack.c.l.b16 %v1974
      %v2009 = vunpack.c.h.b16 %v1974
      %v2010 = vunpack.c.l.b16 %v1975
      %v2011 = vunpack.c.h.b16 %v1975
      %v2012 = vunpack.c.l.b16 %v1976
      %v2013 = vunpack.c.h.b16 %v1976
      %v2014 = vunpack.c.l.b16 %v1977
      %v2015 = vunpack.c.h.b16 %v1977
      %v2016 = vunpack.c.l.b16 %v1978
      %v2017 = vunpack.c.h.b16 %v1978
      %v2018 = vunpack.c.l.b16 %v1979
      %v2019 = vunpack.c.h.b16 %v1979
      %v2020 = vunpack.c.l.b16 %v1980
      %v2021 = vunpack.c.h.b16 %v1980
      %v2022 = vunpack.c.l.b16 %v1981
      %v2023 = vunpack.c.h.b16 %v1981
      %v2024 = vunpack.c.l.b16 %v1982
      %v2025 = vunpack.c.h.b16 %v1982
      %v2026 = vunpack.c.l.b16 %v1983
      %v2027 = vunpack.c.h.b16 %v1983
      %v2028 = vunpack.c.l.b16 %v1984
      %v2029 = vunpack.c.h.b16 %v1984
      %v2030 = vunpack.c.l.b16 %v1985
      %v2031 = vunpack.c.h.b16 %v1985
      %v2032 = vunpack.c.l.b16 %v1986
      %v2033 = vunpack.c.h.b16 %v1986
      %v2034 = vunpack.c.l.b16 %v1987
      %v2035 = vunpack.c.h.b16 %v1987
      %v2036 = vpack.c.b16 %v2006, %v2004
      %v2037 = vpack.c.b16 %v2007, %v2005
      %v2038 = vpack.c.b16 %v2010, %v2008
      %v2039 = vpack.c.b16 %v2011, %v2009
      %v2040 = vpack.c.b16 %v2014, %v2012
      %v2041 = vpack.c.b16 %v2015, %v2013
      %v2042 = vpack.c.b16 %v2018, %v2016
      %v2043 = vpack.c.b16 %v2019, %v2017
      %v2044 = vpack.c.b16 %v2022, %v2020
      %v2045 = vpack.c.b16 %v2023, %v2021
      %v2046 = vpack.c.b16 %v2026, %v2024
      %v2047 = vpack.c.b16 %v2027, %v2025
      %v2048 = vpack.c.b16 %v2030, %v2028
      %v2049 = vpack.c.b16 %v2031, %v2029
      %v2050 = vpack.c.b16 %v2034, %v2032
      %v2051 = vpack.c.b16 %v2035, %v2033
      %2068 = vmatprep.subr.bf16.mxu0 %v2037
      %2069 = vmatpush1.bf16.msra.mxu0 %v2036
      %2070 = vmatprep.subr.bf16.mxu0 %v2039
      %2071 = vmatpush1.bf16.msra.mxu0 %v2038
      %2072 = vmatprep.subr.bf16.mxu0 %v2041
      %2073 = vmatpush1.bf16.msra.mxu0 %v2040
      %2074 = vmatprep.subr.bf16.mxu0 %v2043
      %2075 = vmatpush1.bf16.msra.mxu0 %v2042
      %2076 = vmatprep.subr.bf16.mxu0 %v2045
      %2077 = vmatpush1.bf16.msra.mxu0 %v2044
      %2078 = vmatprep.subr.bf16.mxu0 %v2047
      %2079 = vmatpush1.bf16.msra.mxu0 %v2046
      %2080 = vmatprep.subr.bf16.mxu0 %v2049
      %2081 = vmatpush1.bf16.msra.mxu0 %v2048
      %2082 = vmatprep.subr.bf16.mxu0 %v2051
      %2083 = vmatpush1.bf16.msra.mxu0 %v2050
      %2084 = vmatprep.subr.bf16.mxu0 0
      %2085 = vmatpush1.bf16.msra.mxu0 0
      %2086 = vmatprep.subr.bf16.mxu0 0
      %2087 = vmatpush1.bf16.msra.mxu0 0
      %2088 = vmatprep.subr.bf16.mxu0 0
      %2089 = vmatpush1.bf16.msra.mxu0 0
      %2090 = vmatprep.subr.bf16.mxu0 0
      %2091 = vmatpush1.bf16.msra.mxu0 0
      %2092 = vmatprep.subr.bf16.mxu0 0
      %2093 = vmatpush1.bf16.msra.mxu0 0
      %2094 = vmatprep.subr.bf16.mxu0 0
      %2095 = vmatpush1.bf16.msra.mxu0 0
      %2096 = vmatprep.subr.bf16.mxu0 0
      %2097 = vmatpush1.bf16.msra.mxu0 0
      %2098 = vmatprep.subr.bf16.mxu0 0
      %2099 = vmatpush1.bf16.msra.mxu0 0
      %2100 = vmatprep.mubr.bf16.mxu0 0
      %2101 = vmatmul.mubr.bf16.gmra.mrb[0].mxu0 %v1956
      %v2102 = vpop.f32.mrb[0].mxu0
      %v2103 = vadd.f32 0.0, %v2102
      %v2104 = vpop.f32.mrb[0].mxu0
      %v2105 = vadd.f32 0.0, %v2104
      %v2106 = vpop.f32.mrb[0].mxu0
      %v2107 = vadd.f32 0.0, %v2106
      %v2108 = vpop.f32.mrb[0].mxu0
      %v2109 = vadd.f32 0.0, %v2108
      %2110 = vmatprep.mubr.bf16.mxu0 0
      %2111 = vmatmul.mubr.bf16.gmra.mrb[0].mxu0 %v1957
      %v2112 = vpop.f32.mrb[0].mxu0
      %v2113 = vadd.f32 0.0, %v2112
      %v2114 = vpop.f32.mrb[0].mxu0
      %v2115 = vadd.f32 0.0, %v2114
      %v2116 = vpop.f32.mrb[0].mxu0
      %v2117 = vadd.f32 0.0, %v2116
      %v2118 = vpop.f32.mrb[0].mxu0
      %v2119 = vadd.f32 0.0, %v2118
      %2120 = vmatprep.mubr.bf16.mxu0 0
      %2121 = vmatmul.mubr.bf16.gmra.mrb[0].mxu0 %v1958
      %v2122 = vpop.f32.mrb[0].mxu0
      %v2123 = vadd.f32 0.0, %v2122
      %v2124 = vpop.f32.mrb[0].mxu0
      %v2125 = vadd.f32 0.0, %v2124
      %v2126 = vpop.f32.mrb[0].mxu0
      %v2127 = vadd.f32 0.0, %v2126
      %v2128 = vpop.f32.mrb[0].mxu0
      %v2129 = vadd.f32 0.0, %v2128
      %2130 = vmatprep.mubr.bf16.mxu0 0
      %2131 = vmatmul.mubr.bf16.gmra.mrb[0].mxu0 %v1959
      %v2132 = vpop.f32.mrb[0].mxu0
      %v2133 = vadd.f32 0.0, %v2132
      %v2134 = vpop.f32.mrb[0].mxu0
      %v2135 = vadd.f32 0.0, %v2134
      %v2136 = vpop.f32.mrb[0].mxu0
      %v2137 = vadd.f32 0.0, %v2136
      %v2138 = vpop.f32.mrb[0].mxu0
      %v2139 = vadd.f32 0.0, %v2138
      %2140 = vmatprep.mubr.bf16.mxu0 0
      %2141 = vmatmul.mubr.bf16.gmra.mrb[0].mxu0 %v1960
      %v2142 = vpop.f32.mrb[0].mxu0
      %v2143 = vadd.f32 0.0, %v2142
      %v2144 = vpop.f32.mrb[0].mxu0
      %v2145 = vadd.f32 0.0, %v2144
      %v2146 = vpop.f32.mrb[0].mxu0
      %v2147 = vadd.f32 0.0, %v2146
      %v2148 = vpop.f32.mrb[0].mxu0
      %v2149 = vadd.f32 0.0, %v2148
      %2150 = vmatprep.mubr.bf16.mxu0 0
      %2151 = vmatmul.mubr.bf16.gmra.mrb[0].mxu0 %v1961
      %v2152 = vpop.f32.mrb[0].mxu0
      %v2153 = vadd.f32 0.0, %v2152
      %v2154 = vpop.f32.mrb[0].mxu0
      %v2155 = vadd.f32 0.0, %v2154
      %v2156 = vpop.f32.mrb[0].mxu0
      %v2157 = vadd.f32 0.0, %v2156
      %v2158 = vpop.f32.mrb[0].mxu0
      %v2159 = vadd.f32 0.0, %v2158
      %2160 = vmatprep.mubr.bf16.mxu0 0
      %2161 = vmatmul.mubr.bf16.gmra.mrb[0].mxu0 %v1962
      %v2162 = vpop.f32.mrb[0].mxu0
      %v2163 = vadd.f32 0.0, %v2162
      %v2164 = vpop.f32.mrb[0].mxu0
      %v2165 = vadd.f32 0.0, %v2164
      %v2166 = vpop.f32.mrb[0].mxu0
      %v2167 = vadd.f32 0.0, %v2166
      %v2168 = vpop.f32.mrb[0].mxu0
      %v2169 = vadd.f32 0.0, %v2168
      %2170 = vmatprep.mubr.bf16.mxu0 0
      %2171 = vmatmul.mubr.bf16.gmra.mrb[0].mxu0 %v1963
      %v2172 = vpop.f32.mrb[0].mxu0
      %v2173 = vadd.f32 0.0, %v2172
      %v2174 = vpop.f32.mrb[0].mxu0
      %v2175 = vadd.f32 0.0, %v2174
      %v2176 = vpop.f32.mrb[0].mxu0
      %v2177 = vadd.f32 0.0, %v2176
      %v2178 = vpop.f32.mrb[0].mxu0
      %v2179 = vadd.f32 0.0, %v2178
      %2180 = vmatprep.mubr.bf16.mxu0 0
      %2181 = vmatmul.mubr.bf16.gmra.mrb[0].mxu0 %v1964
      %v2182 = vpop.f32.mrb[0].mxu0
      %v2183 = vadd.f32 0.0, %v2182
      %v2184 = vpop.f32.mrb[0].mxu0
      %v2185 = vadd.f32 0.0, %v2184
      %v2186 = vpop.f32.mrb[0].mxu0
      %v2187 = vadd.f32 0.0, %v2186
      %v2188 = vpop.f32.mrb[0].mxu0
      %v2189 = vadd.f32 0.0, %v2188
      %2190 = vmatprep.mubr.bf16.mxu0 0
      %2191 = vmatmul.mubr.bf16.gmra.mrb[0].mxu0 %v1965
      %v2192 = vpop.f32.mrb[0].mxu0
      %v2193 = vadd.f32 0.0, %v2192
      %v2194 = vpop.f32.mrb[0].mxu0
      %v2195 = vadd.f32 0.0, %v2194
      %v2196 = vpop.f32.mrb[0].mxu0
      %v2197 = vadd.f32 0.0, %v2196
      %v2198 = vpop.f32.mrb[0].mxu0
      %v2199 = vadd.f32 0.0, %v2198
      %2200 = vmatprep.mubr.bf16.mxu0 0
      %2201 = vmatmul.mubr.bf16.gmra.mrb[0].mxu0 %v1966
      %v2202 = vpop.f32.mrb[0].mxu0
      %v2203 = vadd.f32 0.0, %v2202
      %v2204 = vpop.f32.mrb[0].mxu0
      %v2205 = vadd.f32 0.0, %v2204
      %v2206 = vpop.f32.mrb[0].mxu0
      %v2207 = vadd.f32 0.0, %v2206
      %v2208 = vpop.f32.mrb[0].mxu0
      %v2209 = vadd.f32 0.0, %v2208
      %2210 = vmatprep.mubr.bf16.mxu0 0
      %2211 = vmatmul.mubr.bf16.gmra.mrb[0].mxu0 %v1967
      %v2212 = vpop.f32.mrb[0].mxu0
      %v2213 = vadd.f32 0.0, %v2212
      %v2214 = vpop.f32.mrb[0].mxu0
      %v2215 = vadd.f32 0.0, %v2214
      %v2216 = vpop.f32.mrb[0].mxu0
      %v2217 = vadd.f32 0.0, %v2216
      %v2218 = vpop.f32.mrb[0].mxu0
      %v2219 = vadd.f32 0.0, %v2218
      %2220 = vmatprep.mubr.bf16.mxu0 0
      %2221 = vmatmul.mubr.bf16.gmra.mrb[0].mxu0 %v1968
      %v2222 = vpop.f32.mrb[0].mxu0
      %v2223 = vadd.f32 0.0, %v2222
      %v2224 = vpop.f32.mrb[0].mxu0
      %v2225 = vadd.f32 0.0, %v2224
      %v2226 = vpop.f32.mrb[0].mxu0
      %v2227 = vadd.f32 0.0, %v2226
      %v2228 = vpop.f32.mrb[0].mxu0
      %v2229 = vadd.f32 0.0, %v2228
      %2230 = vmatprep.mubr.bf16.mxu0 0
      %2231 = vmatmul.mubr.bf16.gmra.mrb[0].mxu0 %v1969
      %v2232 = vpop.f32.mrb[0].mxu0
      %v2233 = vadd.f32 0.0, %v2232
      %v2234 = vpop.f32.mrb[0].mxu0
      %v2235 = vadd.f32 0.0, %v2234
      %v2236 = vpop.f32.mrb[0].mxu0
      %v2237 = vadd.f32 0.0, %v2236
      %v2238 = vpop.f32.mrb[0].mxu0
      %v2239 = vadd.f32 0.0, %v2238
      %2240 = vmatprep.mubr.bf16.mxu0 0
      %2241 = vmatmul.mubr.bf16.gmra.mrb[0].mxu0 %v1970
      %v2242 = vpop.f32.mrb[0].mxu0
      %v2243 = vadd.f32 0.0, %v2242
      %v2244 = vpop.f32.mrb[0].mxu0
      %v2245 = vadd.f32 0.0, %v2244
      %v2246 = vpop.f32.mrb[0].mxu0
      %v2247 = vadd.f32 0.0, %v2246
      %v2248 = vpop.f32.mrb[0].mxu0
      %v2249 = vadd.f32 0.0, %v2248
      %2250 = vmatprep.mubr.bf16.mxu0 0
      %2251 = vmatmul.mubr.bf16.gmra.mrb[0].mxu0 %v1971
      %v2252 = vpop.f32.mrb[0].mxu0
      %v2253 = vadd.f32 0.0, %v2252
      %v2254 = vpop.f32.mrb[0].mxu0
      %v2255 = vadd.f32 0.0, %v2254
      %v2256 = vpop.f32.mrb[0].mxu0
      %v2257 = vadd.f32 0.0, %v2256
      %v2258 = vpop.f32.mrb[0].mxu0
      %v2259 = vadd.f32 0.0, %v2258
      %2260 = vdwg.mxu0
      %v2261 = vunpack.c.l.bf16 %v469
      %v2262 = vunpack.c.h.bf16 %v469
      %v2263 = vunpack.c.l.bf16 %v470
      %v2264 = vunpack.c.h.bf16 %v470
      %v2265 = vunpack.c.l.bf16 %v471
      %v2266 = vunpack.c.h.bf16 %v471
      %v2267 = vunpack.c.l.bf16 %v472
      %v2268 = vunpack.c.h.bf16 %v472
      %v2269 = vunpack.c.l.bf16 %v473
      %v2270 = vunpack.c.h.bf16 %v473
      %v2271 = vunpack.c.l.bf16 %v474
      %v2272 = vunpack.c.h.bf16 %v474
      %v2273 = vunpack.c.l.bf16 %v475
      %v2274 = vunpack.c.h.bf16 %v475
      %v2275 = vunpack.c.l.bf16 %v476
      %v2276 = vunpack.c.h.bf16 %v476
      %v2277 = vunpack.c.l.bf16 %v477
      %v2278 = vunpack.c.h.bf16 %v477
      %v2279 = vunpack.c.l.bf16 %v478
      %v2280 = vunpack.c.h.bf16 %v478
      %v2281 = vunpack.c.l.bf16 %v479
      %v2282 = vunpack.c.h.bf16 %v479
      %v2283 = vunpack.c.l.bf16 %v480
      %v2284 = vunpack.c.h.bf16 %v480
      %v2285 = vunpack.c.l.bf16 %v481
      %v2286 = vunpack.c.h.bf16 %v481
      %v2287 = vunpack.c.l.bf16 %v482
      %v2288 = vunpack.c.h.bf16 %v482
      %v2289 = vunpack.c.l.bf16 %v483
      %v2290 = vunpack.c.h.bf16 %v483
      %v2291 = vunpack.c.l.bf16 %v484
      %v2292 = vunpack.c.h.bf16 %v484
      %v2293 = vunpack.c.l.bf16 %v485
      %v2294 = vunpack.c.h.bf16 %v485
      %v2295 = vunpack.c.l.bf16 %v486
      %v2296 = vunpack.c.h.bf16 %v486
      %v2297 = vunpack.c.l.bf16 %v487
      %v2298 = vunpack.c.h.bf16 %v487
      %v2299 = vunpack.c.l.bf16 %v488
      %v2300 = vunpack.c.h.bf16 %v488
      %v2301 = vunpack.c.l.bf16 %v489
      %v2302 = vunpack.c.h.bf16 %v489
      %v2303 = vunpack.c.l.bf16 %v490
      %v2304 = vunpack.c.h.bf16 %v490
      %v2305 = vunpack.c.l.bf16 %v491
      %v2306 = vunpack.c.h.bf16 %v491
      %v2307 = vunpack.c.l.bf16 %v492
      %v2308 = vunpack.c.h.bf16 %v492
      %v2309 = vunpack.c.l.bf16 %v493
      %v2310 = vunpack.c.h.bf16 %v493
      %v2311 = vunpack.c.l.bf16 %v494
      %v2312 = vunpack.c.h.bf16 %v494
      %v2313 = vunpack.c.l.bf16 %v495
      %v2314 = vunpack.c.h.bf16 %v495
      %v2315 = vunpack.c.l.bf16 %v496
      %v2316 = vunpack.c.h.bf16 %v496
      %v2317 = vunpack.c.l.bf16 %v497
      %v2318 = vunpack.c.h.bf16 %v497
      %v2319 = vunpack.c.l.bf16 %v498
      %v2320 = vunpack.c.h.bf16 %v498
      %v2321 = vunpack.c.l.bf16 %v499
      %v2322 = vunpack.c.h.bf16 %v499
      %v2323 = vunpack.c.l.bf16 %v500
      %v2324 = vunpack.c.h.bf16 %v500
      %v2325 = vmul.f32 %v2103, %v2261
      %v2326 = vmul.f32 %v2105, %v2262
      %v2327 = vmul.f32 %v2107, %v2263
      %v2328 = vmul.f32 %v2109, %v2264
      %v2329 = vmul.f32 %v2113, %v2265
      %v2330 = vmul.f32 %v2115, %v2266
      %v2331 = vmul.f32 %v2117, %v2267
      %v2332 = vmul.f32 %v2119, %v2268
      %v2333 = vmul.f32 %v2123, %v2269
      %v2334 = vmul.f32 %v2125, %v2270
      %v2335 = vmul.f32 %v2127, %v2271
      %v2336 = vmul.f32 %v2129, %v2272
      %v2337 = vmul.f32 %v2133, %v2273
      %v2338 = vmul.f32 %v2135, %v2274
      %v2339 = vmul.f32 %v2137, %v2275
      %v2340 = vmul.f32 %v2139, %v2276
      %v2341 = vmul.f32 %v2143, %v2277
      %v2342 = vmul.f32 %v2145, %v2278
      %v2343 = vmul.f32 %v2147, %v2279
      %v2344 = vmul.f32 %v2149, %v2280
      %v2345 = vmul.f32 %v2153, %v2281
      %v2346 = vmul.f32 %v2155, %v2282
      %v2347 = vmul.f32 %v2157, %v2283
      %v2348 = vmul.f32 %v2159, %v2284
      %v2349 = vmul.f32 %v2163, %v2285
      %v2350 = vmul.f32 %v2165, %v2286
      %v2351 = vmul.f32 %v2167, %v2287
      %v2352 = vmul.f32 %v2169, %v2288
      %v2353 = vmul.f32 %v2173, %v2289
      %v2354 = vmul.f32 %v2175, %v2290
      %v2355 = vmul.f32 %v2177, %v2291
      %v2356 = vmul.f32 %v2179, %v2292
      %v2357 = vmul.f32 %v2183, %v2293
      %v2358 = vmul.f32 %v2185, %v2294
      %v2359 = vmul.f32 %v2187, %v2295
      %v2360 = vmul.f32 %v2189, %v2296
      %v2361 = vmul.f32 %v2193, %v2297
      %v2362 = vmul.f32 %v2195, %v2298
      %v2363 = vmul.f32 %v2197, %v2299
      %v2364 = vmul.f32 %v2199, %v2300
      %v2365 = vmul.f32 %v2203, %v2301
      %v2366 = vmul.f32 %v2205, %v2302
      %v2367 = vmul.f32 %v2207, %v2303
      %v2368 = vmul.f32 %v2209, %v2304
      %v2369 = vmul.f32 %v2213, %v2305
      %v2370 = vmul.f32 %v2215, %v2306
      %v2371 = vmul.f32 %v2217, %v2307
      %v2372 = vmul.f32 %v2219, %v2308
      %v2373 = vmul.f32 %v2223, %v2309
      %v2374 = vmul.f32 %v2225, %v2310
      %v2375 = vmul.f32 %v2227, %v2311
      %v2376 = vmul.f32 %v2229, %v2312
      %v2377 = vmul.f32 %v2233, %v2313
      %v2378 = vmul.f32 %v2235, %v2314
      %v2379 = vmul.f32 %v2237, %v2315
      %v2380 = vmul.f32 %v2239, %v2316
      %v2381 = vmul.f32 %v2243, %v2317
      %v2382 = vmul.f32 %v2245, %v2318
      %v2383 = vmul.f32 %v2247, %v2319
      %v2384 = vmul.f32 %v2249, %v2320
      %v2385 = vmul.f32 %v2253, %v2321
      %v2386 = vmul.f32 %v2255, %v2322
      %v2387 = vmul.f32 %v2257, %v2323
      %v2388 = vmul.f32 %v2259, %v2324
      %v2389 = vadd.f32 %v2325, %v2326
      %2390 = vadd.xlane.f32.xlu0 %v2389
      %v2391 = vpop.xlane.xlu0 %2390
      %v2392 = vadd.f32 %v2327, %v2328
      %2393 = vadd.xlane.f32.xlu0 %v2392
      %v2394 = vpop.xlane.xlu0 %2393
      %v2395 = vadd.f32 %v2329, %v2330
      %2396 = vadd.xlane.f32.xlu0 %v2395
      %v2397 = vpop.xlane.xlu0 %2396
      %v2398 = vadd.f32 %v2331, %v2332
      %2399 = vadd.xlane.f32.xlu0 %v2398
      %v2400 = vpop.xlane.xlu0 %2399
      %v2401 = vadd.f32 %v2333, %v2334
      %2402 = vadd.xlane.f32.xlu0 %v2401
      %v2403 = vpop.xlane.xlu0 %2402
      %v2404 = vadd.f32 %v2335, %v2336
      %2405 = vadd.xlane.f32.xlu0 %v2404
      %v2406 = vpop.xlane.xlu0 %2405
      %v2407 = vadd.f32 %v2337, %v2338
      %2408 = vadd.xlane.f32.xlu0 %v2407
      %v2409 = vpop.xlane.xlu0 %2408
      %v2410 = vadd.f32 %v2339, %v2340
      %2411 = vadd.xlane.f32.xlu0 %v2410
      %v2412 = vpop.xlane.xlu0 %2411
      %v2413 = vadd.f32 %v2341, %v2342
      %2414 = vadd.xlane.f32.xlu0 %v2413
      %v2415 = vpop.xlane.xlu0 %2414
      %v2416 = vadd.f32 %v2343, %v2344
      %2417 = vadd.xlane.f32.xlu0 %v2416
      %v2418 = vpop.xlane.xlu0 %2417
      %v2419 = vadd.f32 %v2345, %v2346
      %2420 = vadd.xlane.f32.xlu0 %v2419
      %v2421 = vpop.xlane.xlu0 %2420
      %v2422 = vadd.f32 %v2347, %v2348
      %2423 = vadd.xlane.f32.xlu0 %v2422
      %v2424 = vpop.xlane.xlu0 %2423
      %v2425 = vadd.f32 %v2349, %v2350
      %2426 = vadd.xlane.f32.xlu0 %v2425
      %v2427 = vpop.xlane.xlu0 %2426
      %v2428 = vadd.f32 %v2351, %v2352
      %2429 = vadd.xlane.f32.xlu0 %v2428
      %v2430 = vpop.xlane.xlu0 %2429
      %v2431 = vadd.f32 %v2353, %v2354
      %2432 = vadd.xlane.f32.xlu0 %v2431
      %v2433 = vpop.xlane.xlu0 %2432
      %v2434 = vadd.f32 %v2355, %v2356
      %2435 = vadd.xlane.f32.xlu0 %v2434
      %v2436 = vpop.xlane.xlu0 %2435
      %v2437 = vadd.f32 %v2357, %v2358
      %2438 = vadd.xlane.f32.xlu0 %v2437
      %v2439 = vpop.xlane.xlu0 %2438
      %v2440 = vadd.f32 %v2359, %v2360
      %2441 = vadd.xlane.f32.xlu0 %v2440
      %v2442 = vpop.xlane.xlu0 %2441
      %v2443 = vadd.f32 %v2361, %v2362
      %2444 = vadd.xlane.f32.xlu0 %v2443
      %v2445 = vpop.xlane.xlu0 %2444
      %v2446 = vadd.f32 %v2363, %v2364
      %2447 = vadd.xlane.f32.xlu0 %v2446
      %v2448 = vpop.xlane.xlu0 %2447
      %v2449 = vadd.f32 %v2365, %v2366
      %2450 = vadd.xlane.f32.xlu0 %v2449
      %v2451 = vpop.xlane.xlu0 %2450
      %v2452 = vadd.f32 %v2367, %v2368
      %2453 = vadd.xlane.f32.xlu0 %v2452
      %v2454 = vpop.xlane.xlu0 %2453
      %v2455 = vadd.f32 %v2369, %v2370
      %2456 = vadd.xlane.f32.xlu0 %v2455
      %v2457 = vpop.xlane.xlu0 %2456
      %v2458 = vadd.f32 %v2371, %v2372
      %2459 = vadd.xlane.f32.xlu0 %v2458
      %v2460 = vpop.xlane.xlu0 %2459
      %v2461 = vadd.f32 %v2373, %v2374
      %2462 = vadd.xlane.f32.xlu0 %v2461
      %v2463 = vpop.xlane.xlu0 %2462
      %v2464 = vadd.f32 %v2375, %v2376
      %2465 = vadd.xlane.f32.xlu0 %v2464
      %v2466 = vpop.xlane.xlu0 %2465
      %v2467 = vadd.f32 %v2377, %v2378
      %2468 = vadd.xlane.f32.xlu0 %v2467
      %v2469 = vpop.xlane.xlu0 %2468
      %v2470 = vadd.f32 %v2379, %v2380
      %2471 = vadd.xlane.f32.xlu0 %v2470
      %v2472 = vpop.xlane.xlu0 %2471
      %v2473 = vadd.f32 %v2381, %v2382
      %2474 = vadd.xlane.f32.xlu0 %v2473
      %v2475 = vpop.xlane.xlu0 %2474
      %v2476 = vadd.f32 %v2383, %v2384
      %2477 = vadd.xlane.f32.xlu0 %v2476
      %v2478 = vpop.xlane.xlu0 %2477
      %v2479 = vadd.f32 %v2385, %v2386
      %2480 = vadd.xlane.f32.xlu0 %v2479
      %v2481 = vpop.xlane.xlu0 %2480
      %v2482 = vadd.f32 %v2387, %v2388
      %2483 = vadd.xlane.f32.xlu0 %v2482
      %v2484 = vpop.xlane.xlu0 %2483
      %v2485 = vmul.f32 %v1189, %v1189
      %v2486 = vmul.f32 %v1191, %v1191
      %v2487 = vmul.f32 %v1193, %v1193
      %v2488 = vmul.f32 %v1195, %v1195
      %v2489 = vmul.f32 %v1199, %v1199
      %v2490 = vmul.f32 %v1201, %v1201
      %v2491 = vmul.f32 %v1203, %v1203
      %v2492 = vmul.f32 %v1205, %v1205
      %v2493 = vmul.f32 %v1209, %v1209
      %v2494 = vmul.f32 %v1211, %v1211
      %v2495 = vmul.f32 %v1213, %v1213
      %v2496 = vmul.f32 %v1215, %v1215
      %v2497 = vmul.f32 %v1219, %v1219
      %v2498 = vmul.f32 %v1221, %v1221
      %v2499 = vmul.f32 %v1223, %v1223
      %v2500 = vmul.f32 %v1225, %v1225
      %v2501 = vmul.f32 %v1229, %v1229
      %v2502 = vmul.f32 %v1231, %v1231
      %v2503 = vmul.f32 %v1233, %v1233
      %v2504 = vmul.f32 %v1235, %v1235
      %v2505 = vmul.f32 %v1239, %v1239
      %v2506 = vmul.f32 %v1241, %v1241
      %v2507 = vmul.f32 %v1243, %v1243
      %v2508 = vmul.f32 %v1245, %v1245
      %v2509 = vmul.f32 %v1249, %v1249
      %v2510 = vmul.f32 %v1251, %v1251
      %v2511 = vmul.f32 %v1253, %v1253
      %v2512 = vmul.f32 %v1255, %v1255
      %v2513 = vmul.f32 %v1259, %v1259
      %v2514 = vmul.f32 %v1261, %v1261
      %v2515 = vmul.f32 %v1263, %v1263
      %v2516 = vmul.f32 %v1265, %v1265
      %v2517 = vmul.f32 %v1269, %v1269
      %v2518 = vmul.f32 %v1271, %v1271
      %v2519 = vmul.f32 %v1273, %v1273
      %v2520 = vmul.f32 %v1275, %v1275
      %v2521 = vmul.f32 %v1279, %v1279
      %v2522 = vmul.f32 %v1281, %v1281
      %v2523 = vmul.f32 %v1283, %v1283
      %v2524 = vmul.f32 %v1285, %v1285
      %v2525 = vmul.f32 %v1289, %v1289
      %v2526 = vmul.f32 %v1291, %v1291
      %v2527 = vmul.f32 %v1293, %v1293
      %v2528 = vmul.f32 %v1295, %v1295
      %v2529 = vmul.f32 %v1299, %v1299
      %v2530 = vmul.f32 %v1301, %v1301
      %v2531 = vmul.f32 %v1303, %v1303
      %v2532 = vmul.f32 %v1305, %v1305
      %v2533 = vmul.f32 %v1309, %v1309
      %v2534 = vmul.f32 %v1311, %v1311
      %v2535 = vmul.f32 %v1313, %v1313
      %v2536 = vmul.f32 %v1315, %v1315
      %v2537 = vmul.f32 %v1319, %v1319
      %v2538 = vmul.f32 %v1321, %v1321
      %v2539 = vmul.f32 %v1323, %v1323
      %v2540 = vmul.f32 %v1325, %v1325
      %v2541 = vmul.f32 %v1329, %v1329
      %v2542 = vmul.f32 %v1331, %v1331
      %v2543 = vmul.f32 %v1333, %v1333
      %v2544 = vmul.f32 %v1335, %v1335
      %v2545 = vmul.f32 %v1339, %v1339
      %v2546 = vmul.f32 %v1341, %v1341
      %v2547 = vmul.f32 %v1343, %v1343
      %v2548 = vmul.f32 %v1345, %v1345
      %v2549 = vadd.f32 %v2485, %v2486
      %2550 = vadd.xlane.f32.xlu0 %v2549
      %v2551 = vpop.xlane.xlu0 %2550
      %v2552 = vadd.f32 %v2487, %v2488
      %2553 = vadd.xlane.f32.xlu0 %v2552
      %v2554 = vpop.xlane.xlu0 %2553
      %v2555 = vadd.f32 %v2489, %v2490
      %2556 = vadd.xlane.f32.xlu0 %v2555
      %v2557 = vpop.xlane.xlu0 %2556
      %v2558 = vadd.f32 %v2491, %v2492
      %2559 = vadd.xlane.f32.xlu0 %v2558
      %v2560 = vpop.xlane.xlu0 %2559
      %v2561 = vadd.f32 %v2493, %v2494
      %2562 = vadd.xlane.f32.xlu0 %v2561
      %v2563 = vpop.xlane.xlu0 %2562
      %v2564 = vadd.f32 %v2495, %v2496
      %2565 = vadd.xlane.f32.xlu0 %v2564
      %v2566 = vpop.xlane.xlu0 %2565
      %v2567 = vadd.f32 %v2497, %v2498
      %2568 = vadd.xlane.f32.xlu0 %v2567
      %v2569 = vpop.xlane.xlu0 %2568
      %v2570 = vadd.f32 %v2499, %v2500
      %2571 = vadd.xlane.f32.xlu0 %v2570
      %v2572 = vpop.xlane.xlu0 %2571
      %v2573 = vadd.f32 %v2501, %v2502
      %2574 = vadd.xlane.f32.xlu0 %v2573
      %v2575 = vpop.xlane.xlu0 %2574
      %v2576 = vadd.f32 %v2503, %v2504
      %2577 = vadd.xlane.f32.xlu0 %v2576
      %v2578 = vpop.xlane.xlu0 %2577
      %v2579 = vadd.f32 %v2505, %v2506
      %2580 = vadd.xlane.f32.xlu0 %v2579
      %v2581 = vpop.xlane.xlu0 %2580
      %v2582 = vadd.f32 %v2507, %v2508
      %2583 = vadd.xlane.f32.xlu0 %v2582
      %v2584 = vpop.xlane.xlu0 %2583
      %v2585 = vadd.f32 %v2509, %v2510
      %2586 = vadd.xlane.f32.xlu0 %v2585
      %v2587 = vpop.xlane.xlu0 %2586
      %v2588 = vadd.f32 %v2511, %v2512
      %2589 = vadd.xlane.f32.xlu0 %v2588
      %v2590 = vpop.xlane.xlu0 %2589
      %v2591 = vadd.f32 %v2513, %v2514
      %2592 = vadd.xlane.f32.xlu0 %v2591
      %v2593 = vpop.xlane.xlu0 %2592
      %v2594 = vadd.f32 %v2515, %v2516
      %2595 = vadd.xlane.f32.xlu0 %v2594
      %v2596 = vpop.xlane.xlu0 %2595
      %v2597 = vadd.f32 %v2517, %v2518
      %2598 = vadd.xlane.f32.xlu0 %v2597
      %v2599 = vpop.xlane.xlu0 %2598
      %v2600 = vadd.f32 %v2519, %v2520
      %2601 = vadd.xlane.f32.xlu0 %v2600
      %v2602 = vpop.xlane.xlu0 %2601
      %v2603 = vadd.f32 %v2521, %v2522
      %2604 = vadd.xlane.f32.xlu0 %v2603
      %v2605 = vpop.xlane.xlu0 %2604
      %v2606 = vadd.f32 %v2523, %v2524
      %2607 = vadd.xlane.f32.xlu0 %v2606
      %v2608 = vpop.xlane.xlu0 %2607
      %v2609 = vadd.f32 %v2525, %v2526
      %2610 = vadd.xlane.f32.xlu0 %v2609
      %v2611 = vpop.xlane.xlu0 %2610
      %v2612 = vadd.f32 %v2527, %v2528
      %2613 = vadd.xlane.f32.xlu0 %v2612
      %v2614 = vpop.xlane.xlu0 %2613
      %v2615 = vadd.f32 %v2529, %v2530
      %2616 = vadd.xlane.f32.xlu0 %v2615
      %v2617 = vpop.xlane.xlu0 %2616
      %v2618 = vadd.f32 %v2531, %v2532
      %2619 = vadd.xlane.f32.xlu0 %v2618
      %v2620 = vpop.xlane.xlu0 %2619
      %v2621 = vadd.f32 %v2533, %v2534
      %2622 = vadd.xlane.f32.xlu0 %v2621
      %v2623 = vpop.xlane.xlu0 %2622
      %v2624 = vadd.f32 %v2535, %v2536
      %2625 = vadd.xlane.f32.xlu0 %v2624
      %v2626 = vpop.xlane.xlu0 %2625
      %v2627 = vadd.f32 %v2537, %v2538
      %2628 = vadd.xlane.f32.xlu0 %v2627
      %v2629 = vpop.xlane.xlu0 %2628
      %v2630 = vadd.f32 %v2539, %v2540
      %2631 = vadd.xlane.f32.xlu0 %v2630
      %v2632 = vpop.xlane.xlu0 %2631
      %v2633 = vadd.f32 %v2541, %v2542
      %2634 = vadd.xlane.f32.xlu0 %v2633
      %v2635 = vpop.xlane.xlu0 %2634
      %v2636 = vadd.f32 %v2543, %v2544
      %2637 = vadd.xlane.f32.xlu0 %v2636
      %v2638 = vpop.xlane.xlu0 %2637
      %v2639 = vadd.f32 %v2545, %v2546
      %2640 = vadd.xlane.f32.xlu0 %v2639
      %v2641 = vpop.xlane.xlu0 %2640
      %v2642 = vadd.f32 %v2547, %v2548
      %2643 = vadd.xlane.f32.xlu0 %v2642
      %v2644 = vpop.xlane.xlu0 %2643
      %v2645 = vmul.f32 %v2103, %v2103
      %v2646 = vmul.f32 %v2105, %v2105
      %v2647 = vmul.f32 %v2107, %v2107
      %v2648 = vmul.f32 %v2109, %v2109
      %v2649 = vmul.f32 %v2113, %v2113
      %v2650 = vmul.f32 %v2115, %v2115
      %v2651 = vmul.f32 %v2117, %v2117
      %v2652 = vmul.f32 %v2119, %v2119
      %v2653 = vmul.f32 %v2123, %v2123
      %v2654 = vmul.f32 %v2125, %v2125
      %v2655 = vmul.f32 %v2127, %v2127
      %v2656 = vmul.f32 %v2129, %v2129
      %v2657 = vmul.f32 %v2133, %v2133
      %v2658 = vmul.f32 %v2135, %v2135
      %v2659 = vmul.f32 %v2137, %v2137
      %v2660 = vmul.f32 %v2139, %v2139
      %v2661 = vmul.f32 %v2143, %v2143
      %v2662 = vmul.f32 %v2145, %v2145
      %v2663 = vmul.f32 %v2147, %v2147
      %v2664 = vmul.f32 %v2149, %v2149
      %v2665 = vmul.f32 %v2153, %v2153
      %v2666 = vmul.f32 %v2155, %v2155
      %v2667 = vmul.f32 %v2157, %v2157
      %v2668 = vmul.f32 %v2159, %v2159
      %v2669 = vmul.f32 %v2163, %v2163
      %v2670 = vmul.f32 %v2165, %v2165
      %v2671 = vmul.f32 %v2167, %v2167
      %v2672 = vmul.f32 %v2169, %v2169
      %v2673 = vmul.f32 %v2173, %v2173
      %v2674 = vmul.f32 %v2175, %v2175
      %v2675 = vmul.f32 %v2177, %v2177
      %v2676 = vmul.f32 %v2179, %v2179
      %v2677 = vmul.f32 %v2183, %v2183
      %v2678 = vmul.f32 %v2185, %v2185
      %v2679 = vmul.f32 %v2187, %v2187
      %v2680 = vmul.f32 %v2189, %v2189
      %v2681 = vmul.f32 %v2193, %v2193
      %v2682 = vmul.f32 %v2195, %v2195
      %v2683 = vmul.f32 %v2197, %v2197
      %v2684 = vmul.f32 %v2199, %v2199
      %v2685 = vmul.f32 %v2203, %v2203
      %v2686 = vmul.f32 %v2205, %v2205
      %v2687 = vmul.f32 %v2207, %v2207
      %v2688 = vmul.f32 %v2209, %v2209
      %v2689 = vmul.f32 %v2213, %v2213
      %v2690 = vmul.f32 %v2215, %v2215
      %v2691 = vmul.f32 %v2217, %v2217
      %v2692 = vmul.f32 %v2219, %v2219
      %v2693 = vmul.f32 %v2223, %v2223
      %v2694 = vmul.f32 %v2225, %v2225
      %v2695 = vmul.f32 %v2227, %v2227
      %v2696 = vmul.f32 %v2229, %v2229
      %v2697 = vmul.f32 %v2233, %v2233
      %v2698 = vmul.f32 %v2235, %v2235
      %v2699 = vmul.f32 %v2237, %v2237
      %v2700 = vmul.f32 %v2239, %v2239
      %v2701 = vmul.f32 %v2243, %v2243
      %v2702 = vmul.f32 %v2245, %v2245
      %v2703 = vmul.f32 %v2247, %v2247
      %v2704 = vmul.f32 %v2249, %v2249
      %v2705 = vmul.f32 %v2253, %v2253
      %v2706 = vmul.f32 %v2255, %v2255
      %v2707 = vmul.f32 %v2257, %v2257
      %v2708 = vmul.f32 %v2259, %v2259
      %v2709 = vadd.f32 %v2645, %v2646
      %2710 = vadd.xlane.f32.xlu0 %v2709
      %v2711 = vpop.xlane.xlu0 %2710
      %v2712 = vadd.f32 %v2647, %v2648
      %2713 = vadd.xlane.f32.xlu0 %v2712
      %v2714 = vpop.xlane.xlu0 %2713
      %v2715 = vadd.f32 %v2649, %v2650
      %2716 = vadd.xlane.f32.xlu0 %v2715
      %v2717 = vpop.xlane.xlu0 %2716
      %v2718 = vadd.f32 %v2651, %v2652
      %2719 = vadd.xlane.f32.xlu0 %v2718
      %v2720 = vpop.xlane.xlu0 %2719
      %v2721 = vadd.f32 %v2653, %v2654
      %2722 = vadd.xlane.f32.xlu0 %v2721
      %v2723 = vpop.xlane.xlu0 %2722
      %v2724 = vadd.f32 %v2655, %v2656
      %2725 = vadd.xlane.f32.xlu0 %v2724
      %v2726 = vpop.xlane.xlu0 %2725
      %v2727 = vadd.f32 %v2657, %v2658
      %2728 = vadd.xlane.f32.xlu0 %v2727
      %v2729 = vpop.xlane.xlu0 %2728
      %v2730 = vadd.f32 %v2659, %v2660
      %2731 = vadd.xlane.f32.xlu0 %v2730
      %v2732 = vpop.xlane.xlu0 %2731
      %v2733 = vadd.f32 %v2661, %v2662
      %2734 = vadd.xlane.f32.xlu0 %v2733
      %v2735 = vpop.xlane.xlu0 %2734
      %v2736 = vadd.f32 %v2663, %v2664
      %2737 = vadd.xlane.f32.xlu0 %v2736
      %v2738 = vpop.xlane.xlu0 %2737
      %v2739 = vadd.f32 %v2665, %v2666
      %2740 = vadd.xlane.f32.xlu0 %v2739
      %v2741 = vpop.xlane.xlu0 %2740
      %v2742 = vadd.f32 %v2667, %v2668
      %2743 = vadd.xlane.f32.xlu0 %v2742
      %v2744 = vpop.xlane.xlu0 %2743
      %v2745 = vadd.f32 %v2669, %v2670
      %2746 = vadd.xlane.f32.xlu0 %v2745
      %v2747 = vpop.xlane.xlu0 %2746
      %v2748 = vadd.f32 %v2671, %v2672
      %2749 = vadd.xlane.f32.xlu0 %v2748
      %v2750 = vpop.xlane.xlu0 %2749
      %v2751 = vadd.f32 %v2673, %v2674
      %2752 = vadd.xlane.f32.xlu0 %v2751
      %v2753 = vpop.xlane.xlu0 %2752
      %v2754 = vadd.f32 %v2675, %v2676
      %2755 = vadd.xlane.f32.xlu0 %v2754
      %v2756 = vpop.xlane.xlu0 %2755
      %v2757 = vadd.f32 %v2677, %v2678
      %2758 = vadd.xlane.f32.xlu0 %v2757
      %v2759 = vpop.xlane.xlu0 %2758
      %v2760 = vadd.f32 %v2679, %v2680
      %2761 = vadd.xlane.f32.xlu0 %v2760
      %v2762 = vpop.xlane.xlu0 %2761
      %v2763 = vadd.f32 %v2681, %v2682
      %2764 = vadd.xlane.f32.xlu0 %v2763
      %v2765 = vpop.xlane.xlu0 %2764
      %v2766 = vadd.f32 %v2683, %v2684
      %2767 = vadd.xlane.f32.xlu0 %v2766
      %v2768 = vpop.xlane.xlu0 %2767
      %v2769 = vadd.f32 %v2685, %v2686
      %2770 = vadd.xlane.f32.xlu0 %v2769
      %v2771 = vpop.xlane.xlu0 %2770
      %v2772 = vadd.f32 %v2687, %v2688
      %2773 = vadd.xlane.f32.xlu0 %v2772
      %v2774 = vpop.xlane.xlu0 %2773
      %v2775 = vadd.f32 %v2689, %v2690
      %2776 = vadd.xlane.f32.xlu0 %v2775
      %v2777 = vpop.xlane.xlu0 %2776
      %v2778 = vadd.f32 %v2691, %v2692
      %2779 = vadd.xlane.f32.xlu0 %v2778
      %v2780 = vpop.xlane.xlu0 %2779
      %v2781 = vadd.f32 %v2693, %v2694
      %2782 = vadd.xlane.f32.xlu0 %v2781
      %v2783 = vpop.xlane.xlu0 %2782
      %v2784 = vadd.f32 %v2695, %v2696
      %2785 = vadd.xlane.f32.xlu0 %v2784
      %v2786 = vpop.xlane.xlu0 %2785
      %v2787 = vadd.f32 %v2697, %v2698
      %2788 = vadd.xlane.f32.xlu0 %v2787
      %v2789 = vpop.xlane.xlu0 %2788
      %v2790 = vadd.f32 %v2699, %v2700
      %2791 = vadd.xlane.f32.xlu0 %v2790
      %v2792 = vpop.xlane.xlu0 %2791
      %v2793 = vadd.f32 %v2701, %v2702
      %2794 = vadd.xlane.f32.xlu0 %v2793
      %v2795 = vpop.xlane.xlu0 %2794
      %v2796 = vadd.f32 %v2703, %v2704
      %2797 = vadd.xlane.f32.xlu0 %v2796
      %v2798 = vpop.xlane.xlu0 %2797
      %v2799 = vadd.f32 %v2705, %v2706
      %2800 = vadd.xlane.f32.xlu0 %v2799
      %v2801 = vpop.xlane.xlu0 %2800
      %v2802 = vadd.f32 %v2707, %v2708
      %2803 = vadd.xlane.f32.xlu0 %v2802
      %v2804 = vpop.xlane.xlu0 %2803
      %v2805 = vmul.f32 %v2711, 0.00390625
      %v2806 = vmul.f32 %v2714, 0.00390625
      %v2807 = vmul.f32 %v2717, 0.00390625
      %v2808 = vmul.f32 %v2720, 0.00390625
      %v2809 = vmul.f32 %v2723, 0.00390625
      %v2810 = vmul.f32 %v2726, 0.00390625
      %v2811 = vmul.f32 %v2729, 0.00390625
      %v2812 = vmul.f32 %v2732, 0.00390625
      %v2813 = vmul.f32 %v2735, 0.00390625
      %v2814 = vmul.f32 %v2738, 0.00390625
      %v2815 = vmul.f32 %v2741, 0.00390625
      %v2816 = vmul.f32 %v2744, 0.00390625
      %v2817 = vmul.f32 %v2747, 0.00390625
      %v2818 = vmul.f32 %v2750, 0.00390625
      %v2819 = vmul.f32 %v2753, 0.00390625
      %v2820 = vmul.f32 %v2756, 0.00390625
      %v2821 = vmul.f32 %v2759, 0.00390625
      %v2822 = vmul.f32 %v2762, 0.00390625
      %v2823 = vmul.f32 %v2765, 0.00390625
      %v2824 = vmul.f32 %v2768, 0.00390625
      %v2825 = vmul.f32 %v2771, 0.00390625
      %v2826 = vmul.f32 %v2774, 0.00390625
      %v2827 = vmul.f32 %v2777, 0.00390625
      %v2828 = vmul.f32 %v2780, 0.00390625
      %v2829 = vmul.f32 %v2783, 0.00390625
      %v2830 = vmul.f32 %v2786, 0.00390625
      %v2831 = vmul.f32 %v2789, 0.00390625
      %v2832 = vmul.f32 %v2792, 0.00390625
      %v2833 = vmul.f32 %v2795, 0.00390625
      %v2834 = vmul.f32 %v2798, 0.00390625
      %v2835 = vmul.f32 %v2801, 0.00390625
      %v2836 = vmul.f32 %v2804, 0.00390625
      %v2837 = vlaneseq
      %v2838 = vand.u32 %v2837, 127
      %vm2839 = vcmp.eq.s32.totalorder %v2838, 0
      %v2840 = vsel %vm2839, %v2391, 0.0
      %v2841 = vsel %vm2839, %v2394, 0.0
      %v2842 = vsel %vm2839, %v2397, 0.0
      %v2843 = vsel %vm2839, %v2400, 0.0
      %v2844 = vsel %vm2839, %v2403, 0.0
      %v2845 = vsel %vm2839, %v2406, 0.0
      %v2846 = vsel %vm2839, %v2409, 0.0
      %v2847 = vsel %vm2839, %v2412, 0.0
      %v2848 = vsel %vm2839, %v2415, 0.0
      %v2849 = vsel %vm2839, %v2418, 0.0
      %v2850 = vsel %vm2839, %v2421, 0.0
      %v2851 = vsel %vm2839, %v2424, 0.0
      %v2852 = vsel %vm2839, %v2427, 0.0
      %v2853 = vsel %vm2839, %v2430, 0.0
      %v2854 = vsel %vm2839, %v2433, 0.0
      %v2855 = vsel %vm2839, %v2436, 0.0
      %v2856 = vsel %vm2839, %v2439, 0.0
      %v2857 = vsel %vm2839, %v2442, 0.0
      %v2858 = vsel %vm2839, %v2445, 0.0
      %v2859 = vsel %vm2839, %v2448, 0.0
      %v2860 = vsel %vm2839, %v2451, 0.0
      %v2861 = vsel %vm2839, %v2454, 0.0
      %v2862 = vsel %vm2839, %v2457, 0.0
      %v2863 = vsel %vm2839, %v2460, 0.0
      %v2864 = vsel %vm2839, %v2463, 0.0
      %v2865 = vsel %vm2839, %v2466, 0.0
      %v2866 = vsel %vm2839, %v2469, 0.0
      %v2867 = vsel %vm2839, %v2472, 0.0
      %v2868 = vsel %vm2839, %v2475, 0.0
      %v2869 = vsel %vm2839, %v2478, 0.0
      %v2870 = vsel %vm2839, %v2481, 0.0
      %v2871 = vsel %vm2839, %v2484, 0.0
      %vm2872 = vcmp.eq.s32.totalorder %v2838, 1
      %v2873 = vsel %vm2872, %v2551, 0.0
      %v2874 = vsel %vm2872, %v2554, 0.0
      %v2875 = vsel %vm2872, %v2557, 0.0
      %v2876 = vsel %vm2872, %v2560, 0.0
      %v2877 = vsel %vm2872, %v2563, 0.0
      %v2878 = vsel %vm2872, %v2566, 0.0
      %v2879 = vsel %vm2872, %v2569, 0.0
      %v2880 = vsel %vm2872, %v2572, 0.0
      %v2881 = vsel %vm2872, %v2575, 0.0
      %v2882 = vsel %vm2872, %v2578, 0.0
      %v2883 = vsel %vm2872, %v2581, 0.0
      %v2884 = vsel %vm2872, %v2584, 0.0
      %v2885 = vsel %vm2872, %v2587, 0.0
      %v2886 = vsel %vm2872, %v2590, 0.0
      %v2887 = vsel %vm2872, %v2593, 0.0
      %v2888 = vsel %vm2872, %v2596, 0.0
      %v2889 = vsel %vm2872, %v2599, 0.0
      %v2890 = vsel %vm2872, %v2602, 0.0
      %v2891 = vsel %vm2872, %v2605, 0.0
      %v2892 = vsel %vm2872, %v2608, 0.0
      %v2893 = vsel %vm2872, %v2611, 0.0
      %v2894 = vsel %vm2872, %v2614, 0.0
      %v2895 = vsel %vm2872, %v2617, 0.0
      %v2896 = vsel %vm2872, %v2620, 0.0
      %v2897 = vsel %vm2872, %v2623, 0.0
      %v2898 = vsel %vm2872, %v2626, 0.0
      %v2899 = vsel %vm2872, %v2629, 0.0
      %v2900 = vsel %vm2872, %v2632, 0.0
      %v2901 = vsel %vm2872, %v2635, 0.0
      %v2902 = vsel %vm2872, %v2638, 0.0
      %v2903 = vsel %vm2872, %v2641, 0.0
      %v2904 = vsel %vm2872, %v2644, 0.0
      %v2905 = vadd.f32 %v2840, %v2873
      %v2906 = vadd.f32 %v2841, %v2874
      %v2907 = vadd.f32 %v2842, %v2875
      %v2908 = vadd.f32 %v2843, %v2876
      %v2909 = vadd.f32 %v2844, %v2877
      %v2910 = vadd.f32 %v2845, %v2878
      %v2911 = vadd.f32 %v2846, %v2879
      %v2912 = vadd.f32 %v2847, %v2880
      %v2913 = vadd.f32 %v2848, %v2881
      %v2914 = vadd.f32 %v2849, %v2882
      %v2915 = vadd.f32 %v2850, %v2883
      %v2916 = vadd.f32 %v2851, %v2884
      %v2917 = vadd.f32 %v2852, %v2885
      %v2918 = vadd.f32 %v2853, %v2886
      %v2919 = vadd.f32 %v2854, %v2887
      %v2920 = vadd.f32 %v2855, %v2888
      %v2921 = vadd.f32 %v2856, %v2889
      %v2922 = vadd.f32 %v2857, %v2890
      %v2923 = vadd.f32 %v2858, %v2891
      %v2924 = vadd.f32 %v2859, %v2892
      %v2925 = vadd.f32 %v2860, %v2893
      %v2926 = vadd.f32 %v2861, %v2894
      %v2927 = vadd.f32 %v2862, %v2895
      %v2928 = vadd.f32 %v2863, %v2896
      %v2929 = vadd.f32 %v2864, %v2897
      %v2930 = vadd.f32 %v2865, %v2898
      %v2931 = vadd.f32 %v2866, %v2899
      %v2932 = vadd.f32 %v2867, %v2900
      %v2933 = vadd.f32 %v2868, %v2901
      %v2934 = vadd.f32 %v2869, %v2902
      %v2935 = vadd.f32 %v2870, %v2903
      %v2936 = vadd.f32 %v2871, %v2904
      %vm2937 = vcmp.eq.s32.totalorder %v2838, 2
      %v2938 = vsel %vm2937, %v2805, 0.0
      %v2939 = vsel %vm2937, %v2806, 0.0
      %v2940 = vsel %vm2937, %v2807, 0.0
      %v2941 = vsel %vm2937, %v2808, 0.0
      %v2942 = vsel %vm2937, %v2809, 0.0
      %v2943 = vsel %vm2937, %v2810, 0.0
      %v2944 = vsel %vm2937, %v2811, 0.0
      %v2945 = vsel %vm2937, %v2812, 0.0
      %v2946 = vsel %vm2937, %v2813, 0.0
      %v2947 = vsel %vm2937, %v2814, 0.0
      %v2948 = vsel %vm2937, %v2815, 0.0
      %v2949 = vsel %vm2937, %v2816, 0.0
      %v2950 = vsel %vm2937, %v2817, 0.0
      %v2951 = vsel %vm2937, %v2818, 0.0
      %v2952 = vsel %vm2937, %v2819, 0.0
      %v2953 = vsel %vm2937, %v2820, 0.0
      %v2954 = vsel %vm2937, %v2821, 0.0
      %v2955 = vsel %vm2937, %v2822, 0.0
      %v2956 = vsel %vm2937, %v2823, 0.0
      %v2957 = vsel %vm2937, %v2824, 0.0
      %v2958 = vsel %vm2937, %v2825, 0.0
      %v2959 = vsel %vm2937, %v2826, 0.0
      %v2960 = vsel %vm2937, %v2827, 0.0
      %v2961 = vsel %vm2937, %v2828, 0.0
      %v2962 = vsel %vm2937, %v2829, 0.0
      %v2963 = vsel %vm2937, %v2830, 0.0
      %v2964 = vsel %vm2937, %v2831, 0.0
      %v2965 = vsel %vm2937, %v2832, 0.0
      %v2966 = vsel %vm2937, %v2833, 0.0
      %v2967 = vsel %vm2937, %v2834, 0.0
      %v2968 = vsel %vm2937, %v2835, 0.0
      %v2969 = vsel %vm2937, %v2836, 0.0
      %v2970 = vadd.f32 %v2905, %v2938
      %v2971 = vadd.f32 %v2906, %v2939
      %v2972 = vadd.f32 %v2907, %v2940
      %v2973 = vadd.f32 %v2908, %v2941
      %v2974 = vadd.f32 %v2909, %v2942
      %v2975 = vadd.f32 %v2910, %v2943
      %v2976 = vadd.f32 %v2911, %v2944
      %v2977 = vadd.f32 %v2912, %v2945
      %v2978 = vadd.f32 %v2913, %v2946
      %v2979 = vadd.f32 %v2914, %v2947
      %v2980 = vadd.f32 %v2915, %v2948
      %v2981 = vadd.f32 %v2916, %v2949
      %v2982 = vadd.f32 %v2917, %v2950
      %v2983 = vadd.f32 %v2918, %v2951
      %v2984 = vadd.f32 %v2919, %v2952
      %v2985 = vadd.f32 %v2920, %v2953
      %v2986 = vadd.f32 %v2921, %v2954
      %v2987 = vadd.f32 %v2922, %v2955
      %v2988 = vadd.f32 %v2923, %v2956
      %v2989 = vadd.f32 %v2924, %v2957
      %v2990 = vadd.f32 %v2925, %v2958
      %v2991 = vadd.f32 %v2926, %v2959
      %v2992 = vadd.f32 %v2927, %v2960
      %v2993 = vadd.f32 %v2928, %v2961
      %v2994 = vadd.f32 %v2929, %v2962
      %v2995 = vadd.f32 %v2930, %v2963
      %v2996 = vadd.f32 %v2931, %v2964
      %v2997 = vadd.f32 %v2932, %v2965
      %v2998 = vadd.f32 %v2933, %v2966
      %v2999 = vadd.f32 %v2934, %v2967
      %v3000 = vadd.f32 %v2935, %v2968
      %v3001 = vadd.f32 %v2936, %v2969
      %vm3002 = vcmask 64512
      %3003 = vst.msk [vmem:[%s433] sm:$0xff] %vm3002, %v2970
      %3004 = vst.msk [vmem:[%s433 + $0x8] sm:$0xff] %vm3002, %v2971
      %3005 = vst.msk [vmem:[%s433 + $0x10] sm:$0xff] %vm3002, %v2972
      %3006 = vst.msk [vmem:[%s433 + $0x18] sm:$0xff] %vm3002, %v2973
      %3007 = vst.msk [vmem:[%s433 + $0x20] sm:$0xff] %vm3002, %v2974
      %3008 = vst.msk [vmem:[%s433 + $0x28] sm:$0xff] %vm3002, %v2975
      %3009 = vst.msk [vmem:[%s433 + $0x30] sm:$0xff] %vm3002, %v2976
      %3010 = vst.msk [vmem:[%s433 + $0x38] sm:$0xff] %vm3002, %v2977
      %3011 = vst.msk [vmem:[%s433 + $0x40] sm:$0xff] %vm3002, %v2978
      %3012 = vst.msk [vmem:[%s433 + $0x48] sm:$0xff] %vm3002, %v2979
      %3013 = vst.msk [vmem:[%s433 + $0x50] sm:$0xff] %vm3002, %v2980
      %3014 = vst.msk [vmem:[%s433 + $0x58] sm:$0xff] %vm3002, %v2981
      %3015 = vst.msk [vmem:[%s433 + $0x60] sm:$0xff] %vm3002, %v2982
      %3016 = vst.msk [vmem:[%s433 + $0x68] sm:$0xff] %vm3002, %v2983
      %3017 = vst.msk [vmem:[%s433 + $0x70] sm:$0xff] %vm3002, %v2984
      %3018 = vst.msk [vmem:[%s433 + $0x78] sm:$0xff] %vm3002, %v2985
      %3019 = vst.msk [vmem:[%s433 + $0x80] sm:$0xff] %vm3002, %v2986
      %3020 = vst.msk [vmem:[%s433 + $0x88] sm:$0xff] %vm3002, %v2987
      %3021 = vst.msk [vmem:[%s433 + $0x90] sm:$0xff] %vm3002, %v2988
      %3022 = vst.msk [vmem:[%s433 + $0x98] sm:$0xff] %vm3002, %v2989
      %3023 = vst.msk [vmem:[%s433 + $0xa0] sm:$0xff] %vm3002, %v2990
      %3024 = vst.msk [vmem:[%s433 + $0xa8] sm:$0xff] %vm3002, %v2991
      %3025 = vst.msk [vmem:[%s433 + $0xb0] sm:$0xff] %vm3002, %v2992
      %3026 = vst.msk [vmem:[%s433 + $0xb8] sm:$0xff] %vm3002, %v2993
      %3027 = vst.msk [vmem:[%s433 + $0xc0] sm:$0xff] %vm3002, %v2994
      %3028 = vst.msk [vmem:[%s433 + $0xc8] sm:$0xff] %vm3002, %v2995
      %3029 = vst.msk [vmem:[%s433 + $0xd0] sm:$0xff] %vm3002, %v2996
      %3030 = vst.msk [vmem:[%s433 + $0xd8] sm:$0xff] %vm3002, %v2997
      %3031 = vst.msk [vmem:[%s433 + $0xe0] sm:$0xff] %vm3002, %v2998
      %3032 = vst.msk [vmem:[%s433 + $0xe8] sm:$0xff] %vm3002, %v2999
      %3033 = vst.msk [vmem:[%s433 + $0xf0] sm:$0xff] %vm3002, %v3000
      %3034 = vst.msk [vmem:[%s433 + $0xf8] sm:$0xff] %vm3002, %v3001
      %s3035 = smul.u32 32, %s24
      %p3036 = scmp.lt.s32.totalorder %s3035, 63
      %s3037 = scalar_select %p3036, %s3035, 63
      %s3038 = smul.addr %s3037, 2
      %s3039 = smul.addr %s3038, 8
      %s3040 = scalar_lea.vmem %s10, %s3039
      %s3041 = smul.u32 32, %s24
      %p3042 = scmp.lt.s32.totalorder %s3041, 63
      %s3043 = scalar_select %p3042, %s3041, 63
      %s3044 = smul.addr %s3043, 8
      %s3045 = scalar_lea.vmem %s11, %s3044
      // Predicated region
      $region61: #{reg_aug_mnist_forward.1} parent=59 // pred_check
        %p3046 = pneg %p262
      $region62: #{reg_aug_mnist_forward.1} parent=59 // pred_check_branch
        %3048 = sbr.rel (%p3046) target = $region64
      $region63: #{reg_aug_mnist_forward.1} parent=59 // pred_region
        %s3049 = smul.u32 32, %s24
      $region64: #{reg_aug_mnist_forward.1} parent=59 // pred_fallthru
        _
      // Predicated region
      $region65: #{reg_aug_mnist_forward.1} parent=59 // pred_check
        %p3050 = pneg %p288
      $region66: #{reg_aug_mnist_forward.1} parent=59 // pred_check_branch
        %3052 = sbr.rel (%p3050) target = $region68
      $region67: #{reg_aug_mnist_forward.1} parent=59 // pred_region
        %s3053 = smul.u32 32, %s24
      $region68: #{reg_aug_mnist_forward.1} parent=59 // pred_fallthru
        _
    $region60: #{reg_aug_mnist_forward.1} parent=5 // pred_fallthru
      _
    %p3054 = scmp.le.s32.totalorder 2, %s19
    // Predicated region
    $region69: #{reg_aug_mnist_forward.1} parent=5 // pred_check
      %p3055 = pneg %p3054
    $region70: #{reg_aug_mnist_forward.1} parent=5 // pred_check_branch
      %3057 = sbr.rel (%p3055) target = $region72
    $region71: #{reg_aug_mnist_forward.1} parent=5 // pred_region
      %s3058 = ssub.s32 %s19, 2
      // Predicated region
      $region73: #{reg_aug_mnist_forward.1} parent=71 // pred_check
        %p3059 = pneg %p268
      $region74: #{reg_aug_mnist_forward.1} parent=71 // pred_check_branch
        %3061 = sbr.rel (%p3059) target = $region76
      $region75: #{reg_aug_mnist_forward.1} parent=71 // pred_region
        %s3062 = smul.u32 32, %s25
        %p3063 = scmp.lt.s32.totalorder %s3062, 63
        %s3064 = scalar_select %p3063, %s3062, 63
        %s3065 = smul.addr %s3064, 2
        %s3066 = smul.addr %s3065, 8
        %s3067 = scalar_lea.vmem %s10, %s3066
      $region76: #{reg_aug_mnist_forward.1} parent=71 // pred_fallthru
        _
      // Predicated region
      $region77: #{reg_aug_mnist_forward.1} parent=71 // pred_check
        %p3068 = pneg %p294
      $region78: #{reg_aug_mnist_forward.1} parent=71 // pred_check_branch
        %3070 = sbr.rel (%p3068) target = $region80
      $region79: #{reg_aug_mnist_forward.1} parent=71 // pred_region
        %s3071 = smul.u32 32, %s25
        %p3072 = scmp.lt.s32.totalorder %s3071, 63
        %s3073 = scalar_select %p3072, %s3071, 63
        %s3074 = smul.addr %s3073, 8
        %s3075 = scalar_lea.vmem %s11, %s3074
      $region80: #{reg_aug_mnist_forward.1} parent=71 // pred_fallthru
        _
    $region72: #{reg_aug_mnist_forward.1} parent=5 // pred_fallthru
      _
  $region6: #{reg_aug_mnist_forward.1} parent=0 // loop_footer
    %s23 = sadd.s32 1, %s19
  $region7: #{reg_aug_mnist_forward.1} parent=0 // loop_footer_branch
    %18 = sbr.rel target = $region3
  $region8: #{reg_aug_mnist_forward.1} parent=0 // loop_exit
    _

</llo_original>
